<compile_context>
chip_gen: v5e
topology: v5e:2x2
jax: 0.10.0
libtpu: 0.0.40
codegen_flags: <defaults>
</compile_context>

<pallas_src>
import math
from functools import partial

import jax
import jax.numpy as jnp
from jax import lax
from jax.experimental import pallas as pl
from jax.experimental.pallas import tpu as pltpu


def _round_up(n, m):
    return ((n + m - 1) // m) * m


# ---------------------------------------------------------------------------
# Fused kernel: all layers in one invocation, everything VMEM-resident.
# ---------------------------------------------------------------------------

def _tcn_fused_kernel(x_ref, w_ref, vec_ref, o_ref, *,
                      n_layers, B, T, dilations, cin_p0, cout_p, cmax_p):
    BT = B * T
    x = x_ref[...]                                          # (BT, cin_p0) f32

    # Per-row time index within each batch element, built in-kernel (no tpos input).
    row = lax.broadcasted_iota(jnp.int32, (BT, 1), 0)
    t = row % T                                             # (BT, 1) int32

    cin_p = cin_p0
    for l in range(n_layers):
        d = int(dilations[l])
        base = 3 * l * cmax_p                               # static row offset into w_ref
        v = vec_ref[l]                                      # (8, cout_p) f32
        bias, gamma, beta = v[0:1, :], v[1:2, :], v[2:3, :]

        # --- dilated conv as 3 accumulating bf16 MXU matmuls (f32 accumulation) ---
        # Center tap (k = 1).
        acc = jnp.dot(x.astype(jnp.bfloat16),
                      w_ref[pl.ds(base + cmax_p, cin_p), :],
                      preferred_element_type=jnp.float32)
        if d < T:
            # Shifted taps via XLU sublane roll + zero-padding / batch-boundary masks.
            x_prev = jnp.where(t >= d, pltpu.roll(x, d, axis=0), 0.0)        # x[t - d]
            x_next = jnp.where(t < T - d, pltpu.roll(x, BT - d, axis=0), 0.0)  # x[t + d]
            acc = acc + jnp.dot(x_prev.astype(jnp.bfloat16),
                                w_ref[pl.ds(base, cin_p), :],
                                preferred_element_type=jnp.float32)
            acc = acc + jnp.dot(x_next.astype(jnp.bfloat16),
                                w_ref[pl.ds(base + 2 * cmax_p, cin_p), :],
                                preferred_element_type=jnp.float32)
        # else: both shifted taps fall entirely inside the zero padding -> skipped.

        # --- conv bias + ReLU ---
        y = jnp.maximum(acc + bias, 0.0)

        # --- BatchNorm1d (train-mode batch stats over all B*T rows, f32, two-pass var) ---
        mean = jnp.mean(y, axis=0, keepdims=True)
        diff = y - mean
        var = jnp.mean(diff * diff, axis=0, keepdims=True)
        scale = gamma * lax.rsqrt(var + 1e-5)               # folded affine
        shift = beta - mean * scale
        x = y * scale + shift                               # 2 VPU ops per element
        cin_p = cout_p

    o_ref[...] = x.astype(o_ref.dtype)                      # lane-dense (BT, cout_p) store


# ---------------------------------------------------------------------------
# Wrapper: layout/packing + single pallas_call (3 inputs total)
# ---------------------------------------------------------------------------

def tcn_forward(x, params, dilations):
    """x: (B, T, input_dim) float32 -> (B, T, output_dim) float32."""
    B, T, Cin = x.shape
    layers = params["layers"]
    L = len(layers)
    Cout, _, K = layers[0]["w"].shape
    assert K == 3, "kernel_size=3 assumed"
    Cin_p0 = _round_up(Cin, 128)
    Cout_p = _round_up(Cout, 128)
    Cmax_p = max(Cin_p0, Cout_p)

    # Channels-last slab, batch collapsed into the matmul M dim, 128-lane channel padding.
    x2 = jnp.zeros((B * T, Cin_p0), jnp.float32).at[:, :Cin].set(
        x.reshape(B * T, Cin).astype(jnp.float32))

    # ONE bf16 weight slab: block (3l + k) (Cmax_p rows) holds w_l[:, :, k].T (zero-padded).
    w_slab = jnp.zeros((L * 3 * Cmax_p, Cout_p), jnp.float32)
    # ONE f32 vector slab: per layer an 8-sublane-aligned block; rows 0/1/2 = bias/gamma/beta.
    vec_slab = jnp.zeros((L, 8, Cout_p), jnp.float32)
    for l, layer in enumerate(layers):
        w = layer["w"]                                       # torch layout (Cout_l, Cin_l, K)
        cout_l, cin_l, _ = w.shape
        for k in range(K):
            r0 = (3 * l + k) * Cmax_p
            w_slab = w_slab.at[r0:r0 + cin_l, :cout_l].set(w[:, :, k].T)
        vec_slab = vec_slab.at[l, 0, :cout_l].set(layer["b"])
        vec_slab = vec_slab.at[l, 1, :cout_l].set(layer["gamma"])
        vec_slab = vec_slab.at[l, 2, :cout_l].set(layer["beta"])
    w_slab = w_slab.astype(jnp.bfloat16)

    kernel = partial(_tcn_fused_kernel, n_layers=L, B=B, T=T,
                     dilations=tuple(int(d) for d in dilations),
                     cin_p0=Cin_p0, cout_p=Cout_p, cmax_p=Cmax_p)

    # VMEM limit derived from the actual slab footprint (capped at 32 MiB: v7x-safe).
    act_bytes = B * T * Cmax_p * 4
    footprint = w_slab.size * 2 + vec_slab.size * 4 + 8 * act_bytes
    vmem_limit = int(min(max(2 * footprint, 8 << 20), 32 << 20))

    out = pl.pallas_call(
        kernel,
        out_shape=jax.ShapeDtypeStruct((B * T, Cout_p), jnp.float32),
        compiler_params=pltpu.CompilerParams(vmem_limit_bytes=vmem_limit),
    )(x2, w_slab, vec_slab)
    return out[:, :Cout].reshape(B, T, Cout)


# ---------------------------------------------------------------------------
# Parameter init (torch-like layout) and pure-JAX reference for verification
# ---------------------------------------------------------------------------

def init_params(key, input_dim, output_dim, num_layers, kernel_size=3):
    layers = []
    keys = jax.random.split(key, num_layers)
    for i in range(num_layers):
        cin = input_dim if i == 0 else output_dim
        k1, k2, k3, k4 = jax.random.split(keys[i], 4)
        bound = 1.0 / math.sqrt(cin * kernel_size)
        layers.append(dict(
            w=jax.random.uniform(k1, (output_dim, cin, kernel_size), jnp.float32,
                                 minval=-bound, maxval=bound),
            b=jax.random.uniform(k2, (output_dim,), jnp.float32,
                                 minval=-bound, maxval=bound),
            gamma=1.0 + 0.1 * jax.random.normal(k3, (output_dim,), jnp.float32),
            beta=0.1 * jax.random.normal(k4, (output_dim,), jnp.float32),
        ))
    return dict(layers=layers)


def tcn_reference(x, params, dilations, eps=1e-5):
    """Pure-JAX reference mirroring the PyTorch module (bf16 matmul inputs, f32 accum)."""
    y = jnp.transpose(x, (0, 2, 1))                          # (B, C, T), torch layout
    for layer, d in zip(params["layers"], dilations):
        y = jax.lax.conv_general_dilated(
            y.astype(jnp.bfloat16), layer["w"].astype(jnp.bfloat16),
            window_strides=(1,), padding=[(d, d)], rhs_dilation=(d,),
            dimension_numbers=("NCH", "OIH", "NCH"),
            preferred_element_type=jnp.float32)
        y = y + layer["b"][None, :, None]
        y = jnp.maximum(y, 0.0)                              # ReLU
        mean = jnp.mean(y, axis=(0, 2), keepdims=True)       # BatchNorm1d (train-mode stats)
        var = jnp.mean((y - mean) ** 2, axis=(0, 2), keepdims=True)
        y = (y - mean) * jax.lax.rsqrt(var + eps)
        y = y * layer["gamma"][None, :, None] + layer["beta"][None, :, None]
    return jnp.transpose(y, (0, 2, 1))                       # back to (B, T, C)


# ---------------------------------------------------------------------------
# Main
# ---------------------------------------------------------------------------

if __name__ == "__main__":
    B, T = 2, 32
    INPUT_DIM, OUTPUT_DIM = 64, 128
    NUM_LAYERS, KERNEL_SIZE, DILATION_GROWTH = 5, 3, 2
    dilations = [DILATION_GROWTH ** i for i in range(NUM_LAYERS)]   # 1, 2, 4, 8, 16

    key = jax.random.PRNGKey(0)
    kx, kp = jax.random.split(key)
    x = jax.random.normal(kx, (B, T, INPUT_DIM), jnp.float32)
    params = init_params(kp, INPUT_DIM, OUTPUT_DIM, NUM_LAYERS, KERNEL_SIZE)

    out = tcn_forward(x, params, dilations)
    out = jax.block_until_ready(out)
    assert out.shape == (B, T, OUTPUT_DIM), out.shape
    assert bool(jnp.all(jnp.isfinite(out)))

    ref = tcn_reference(x, params, dilations)
    max_err = float(jnp.max(jnp.abs(out - ref)))
    assert max_err < 1e-2, f"max abs error vs reference: {max_err}"

    print("KERNEL_OK")
</pallas_src>

<mosaic_0001>
module attributes {stable_mosaic.version = 11 : i64} {
  func.func @_tcn_fused_kernel(%arg0: memref<64x128xf32, #tpu.memory_space<vmem>>, %arg1: memref<1920x128xbf16, #tpu.memory_space<vmem>>, %arg2: memref<5x8x128xf32, #tpu.memory_space<vmem>>, %arg3: memref<64x128xf32, #tpu.memory_space<vmem>>) attributes {dimension_semantics = [], scalar_prefetch = 0 : i64, scratch_operands = 0 : i64, tpu.core_type = #tpu.core_type<tc>} {
    %c0 = arith.constant 0 : index
    %c0_0 = arith.constant 0 : index
    %0 = vector.load %arg0[%c0, %c0_0] : memref<64x128xf32, #tpu.memory_space<vmem>>, vector<64x128xf32>
    %1 = tpu.iota {dimensions = array<i32: 0>} : vector<64x1xi32>
    %c32_i32 = arith.constant 32 : i32
    %c0_i32 = arith.constant 0 : i32
    %2 = arith.cmpi eq, %c32_i32, %c0_i32 : i32
    %c1_i32 = arith.constant 1 : i32
    %3 = arith.select %2, %c1_i32, %c32_i32 : i32
    %4 = vector.broadcast %3 : i32 to vector<64x1xi32>
    %5 = arith.remsi %1, %4 : vector<64x1xi32>
    %c0_i32_1 = arith.constant 0 : i32
    %6 = vector.broadcast %c0_i32_1 : i32 to vector<64x1xi32>
    %7 = arith.cmpi ne, %5, %6 : vector<64x1xi32>
    %c0_i32_2 = arith.constant 0 : i32
    %8 = vector.broadcast %c0_i32_2 : i32 to vector<64x1xi32>
    %9 = arith.cmpi slt, %5, %8 : vector<64x1xi32>
    %c0_i32_3 = arith.constant 0 : i32
    %10 = arith.cmpi slt, %3, %c0_i32_3 : i32
    %11 = vector.broadcast %10 : i1 to vector<64x1xi1>
    %12 = vector.broadcast %11 : vector<64x1xi1> to vector<64x1xi1>
    %13 = arith.xori %9, %12 : vector<64x1xi1>
    %14 = arith.andi %13, %7 : vector<64x1xi1>
    %15 = vector.broadcast %3 : i32 to vector<64x1xi32>
    %16 = arith.addi %5, %15 : vector<64x1xi32>
    %17 = arith.select %14, %16, %5 : vector<64x1xi1>, vector<64x1xi32>
    %c0_4 = arith.constant 0 : index
    %c0_5 = arith.constant 0 : index
    %c0_6 = arith.constant 0 : index
    %18 = vector.load %arg2[%c0_4, %c0_5, %c0_6] : memref<5x8x128xf32, #tpu.memory_space<vmem>>, vector<1x8x128xf32>
    %19 = vector.shape_cast %18 : vector<1x8x128xf32> to vector<8x128xf32>
    %20 = vector.extract_strided_slice %19 {offsets = [0, 0], sizes = [1, 128], strides = [1, 1]} : vector<8x128xf32> to vector<1x128xf32>
    %21 = vector.extract_strided_slice %19 {offsets = [1, 0], sizes = [1, 128], strides = [1, 1]} : vector<8x128xf32> to vector<1x128xf32>
    %22 = vector.extract_strided_slice %19 {offsets = [2, 0], sizes = [1, 128], strides = [1, 1]} : vector<8x128xf32> to vector<1x128xf32>
    %23 = arith.truncf %0 : vector<64x128xf32> to vector<64x128xbf16>
    %c128 = arith.constant 128 : index
    %c0_7 = arith.constant 0 : index
    %24 = vector.load %arg1[%c128, %c0_7] : memref<1920x128xbf16, #tpu.memory_space<vmem>>, vector<128x128xbf16>
    %cst = arith.constant dense<0.000000e+00> : vector<64x128xf32>
    %25 = tpu.matmul %23, %24, %cst {dimension_numbers = #tpu.dot_dimension_numbers<[1], [0], [0], [1], [0, 0, 1, 1], [], []>} : vector<64x128xbf16>, vector<128x128xbf16>, vector<64x128xf32> -> vector<64x128xf32>
    %c1_i32_8 = arith.constant 1 : i32
    %26 = vector.broadcast %c1_i32_8 : i32 to vector<64x1xi32>
    %27 = arith.cmpi sge, %17, %26 : vector<64x1xi32>
    %c1_i32_9 = arith.constant 1 : i32
    %28 = tpu.dynamic_rotate %0 by %c1_i32_9 dim 0 : vector<64x128xf32>, i32 -> vector<64x128xf32>
    %cst_10 = arith.constant 0.000000e+00 : f32
    %29 = vector.shape_cast %27 : vector<64x1xi1> to vector<64x1xi1>
    %30 = vector.broadcast %29 : vector<64x1xi1> to vector<64x128xi1>
    %31 = vector.broadcast %cst_10 : f32 to vector<64x128xf32>
    %32 = arith.select %30, %28, %31 : vector<64x128xi1>, vector<64x128xf32>
    %c31_i32 = arith.constant 31 : i32
    %33 = vector.broadcast %c31_i32 : i32 to vector<64x1xi32>
    %34 = arith.cmpi slt, %17, %33 : vector<64x1xi32>
    %c63_i32 = arith.constant 63 : i32
    %35 = tpu.dynamic_rotate %0 by %c63_i32 dim 0 : vector<64x128xf32>, i32 -> vector<64x128xf32>
    %cst_11 = arith.constant 0.000000e+00 : f32
    %36 = vector.shape_cast %34 : vector<64x1xi1> to vector<64x1xi1>
    %37 = vector.broadcast %36 : vector<64x1xi1> to vector<64x128xi1>
    %38 = vector.broadcast %cst_11 : f32 to vector<64x128xf32>
    %39 = arith.select %37, %35, %38 : vector<64x128xi1>, vector<64x128xf32>
    %40 = arith.truncf %32 : vector<64x128xf32> to vector<64x128xbf16>
    %c0_12 = arith.constant 0 : index
    %c0_13 = arith.constant 0 : index
    %41 = vector.load %arg1[%c0_12, %c0_13] : memref<1920x128xbf16, #tpu.memory_space<vmem>>, vector<128x128xbf16>
    %cst_14 = arith.constant dense<0.000000e+00> : vector<64x128xf32>
    %42 = tpu.matmul %40, %41, %cst_14 {dimension_numbers = #tpu.dot_dimension_numbers<[1], [0], [0], [1], [0, 0, 1, 1], [], []>} : vector<64x128xbf16>, vector<128x128xbf16>, vector<64x128xf32> -> vector<64x128xf32>
    %43 = arith.addf %25, %42 : vector<64x128xf32>
    %44 = arith.truncf %39 : vector<64x128xf32> to vector<64x128xbf16>
    %c256 = arith.constant 256 : index
    %c0_15 = arith.constant 0 : index
    %45 = vector.load %arg1[%c256, %c0_15] : memref<1920x128xbf16, #tpu.memory_space<vmem>>, vector<128x128xbf16>
    %cst_16 = arith.constant dense<0.000000e+00> : vector<64x128xf32>
    %46 = tpu.matmul %44, %45, %cst_16 {dimension_numbers = #tpu.dot_dimension_numbers<[1], [0], [0], [1], [0, 0, 1, 1], [], []>} : vector<64x128xbf16>, vector<128x128xbf16>, vector<64x128xf32> -> vector<64x128xf32>
    %47 = arith.addf %43, %46 : vector<64x128xf32>
    %48 = vector.broadcast %20 : vector<1x128xf32> to vector<64x128xf32>
    %49 = arith.addf %47, %48 : vector<64x128xf32>
    %cst_17 = arith.constant 0.000000e+00 : f32
    %50 = vector.broadcast %cst_17 : f32 to vector<64x128xf32>
    %51 = arith.maximumf %49, %50 : vector<64x128xf32>
    %cst_18 = arith.constant dense<0.000000e+00> : vector<128xf32>
    %52 = vector.multi_reduction <add>, %51, %cst_18 [0] : vector<64x128xf32> to vector<128xf32>
    %53 = vector.shape_cast %52 : vector<128xf32> to vector<1x128xf32>
    %cst_19 = arith.constant 6.400000e+01 : f32
    %54 = vector.broadcast %cst_19 : f32 to vector<1x128xf32>
    %55 = arith.divf %53, %54 : vector<1x128xf32>
    %56 = vector.broadcast %55 : vector<1x128xf32> to vector<64x128xf32>
    %57 = arith.subf %51, %56 : vector<64x128xf32>
    %58 = arith.mulf %57, %57 : vector<64x128xf32>
    %cst_20 = arith.constant dense<0.000000e+00> : vector<128xf32>
    %59 = vector.multi_reduction <add>, %58, %cst_20 [0] : vector<64x128xf32> to vector<128xf32>
    %60 = vector.shape_cast %59 : vector<128xf32> to vector<1x128xf32>
    %cst_21 = arith.constant 6.400000e+01 : f32
    %61 = vector.broadcast %cst_21 : f32 to vector<1x128xf32>
    %62 = arith.divf %60, %61 : vector<1x128xf32>
    %cst_22 = arith.constant 9.99999974E-6 : f32
    %63 = vector.broadcast %cst_22 : f32 to vector<1x128xf32>
    %64 = arith.addf %62, %63 : vector<1x128xf32>
    %65 = math.rsqrt %64 : vector<1x128xf32>
    %66 = arith.mulf %21, %65 : vector<1x128xf32>
    %67 = arith.mulf %55, %66 : vector<1x128xf32>
    %68 = arith.subf %22, %67 : vector<1x128xf32>
    %69 = vector.broadcast %66 : vector<1x128xf32> to vector<64x128xf32>
    %70 = arith.mulf %51, %69 : vector<64x128xf32>
    %71 = vector.broadcast %68 : vector<1x128xf32> to vector<64x128xf32>
    %72 = arith.addf %70, %71 : vector<64x128xf32>
    %c1 = arith.constant 1 : index
    %c0_23 = arith.constant 0 : index
    %c0_24 = arith.constant 0 : index
    %73 = vector.load %arg2[%c1, %c0_23, %c0_24] : memref<5x8x128xf32, #tpu.memory_space<vmem>>, vector<1x8x128xf32>
    %74 = vector.shape_cast %73 : vector<1x8x128xf32> to vector<8x128xf32>
    %75 = vector.extract_strided_slice %74 {offsets = [0, 0], sizes = [1, 128], strides = [1, 1]} : vector<8x128xf32> to vector<1x128xf32>
    %76 = vector.extract_strided_slice %74 {offsets = [1, 0], sizes = [1, 128], strides = [1, 1]} : vector<8x128xf32> to vector<1x128xf32>
    %77 = vector.extract_strided_slice %74 {offsets = [2, 0], sizes = [1, 128], strides = [1, 1]} : vector<8x128xf32> to vector<1x128xf32>
    %78 = arith.truncf %72 : vector<64x128xf32> to vector<64x128xbf16>
    %c512 = arith.constant 512 : index
    %c0_25 = arith.constant 0 : index
    %79 = vector.load %arg1[%c512, %c0_25] : memref<1920x128xbf16, #tpu.memory_space<vmem>>, vector<128x128xbf16>
    %cst_26 = arith.constant dense<0.000000e+00> : vector<64x128xf32>
    %80 = tpu.matmul %78, %79, %cst_26 {dimension_numbers = #tpu.dot_dimension_numbers<[1], [0], [0], [1], [0, 0, 1, 1], [], []>} : vector<64x128xbf16>, vector<128x128xbf16>, vector<64x128xf32> -> vector<64x128xf32>
    %c2_i32 = arith.constant 2 : i32
    %81 = vector.broadcast %c2_i32 : i32 to vector<64x1xi32>
    %82 = arith.cmpi sge, %17, %81 : vector<64x1xi32>
    %c2_i32_27 = arith.constant 2 : i32
    %83 = tpu.dynamic_rotate %72 by %c2_i32_27 dim 0 : vector<64x128xf32>, i32 -> vector<64x128xf32>
    %cst_28 = arith.constant 0.000000e+00 : f32
    %84 = vector.shape_cast %82 : vector<64x1xi1> to vector<64x1xi1>
    %85 = vector.broadcast %84 : vector<64x1xi1> to vector<64x128xi1>
    %86 = vector.broadcast %cst_28 : f32 to vector<64x128xf32>
    %87 = arith.select %85, %83, %86 : vector<64x128xi1>, vector<64x128xf32>
    %c30_i32 = arith.constant 30 : i32
    %88 = vector.broadcast %c30_i32 : i32 to vector<64x1xi32>
    %89 = arith.cmpi slt, %17, %88 : vector<64x1xi32>
    %c62_i32 = arith.constant 62 : i32
    %90 = tpu.dynamic_rotate %72 by %c62_i32 dim 0 : vector<64x128xf32>, i32 -> vector<64x128xf32>
    %cst_29 = arith.constant 0.000000e+00 : f32
    %91 = vector.shape_cast %89 : vector<64x1xi1> to vector<64x1xi1>
    %92 = vector.broadcast %91 : vector<64x1xi1> to vector<64x128xi1>
    %93 = vector.broadcast %cst_29 : f32 to vector<64x128xf32>
    %94 = arith.select %92, %90, %93 : vector<64x128xi1>, vector<64x128xf32>
    %95 = arith.truncf %87 : vector<64x128xf32> to vector<64x128xbf16>
    %c384 = arith.constant 384 : index
    %c0_30 = arith.constant 0 : index
    %96 = vector.load %arg1[%c384, %c0_30] : memref<1920x128xbf16, #tpu.memory_space<vmem>>, vector<128x128xbf16>
    %cst_31 = arith.constant dense<0.000000e+00> : vector<64x128xf32>
    %97 = tpu.matmul %95, %96, %cst_31 {dimension_numbers = #tpu.dot_dimension_numbers<[1], [0], [0], [1], [0, 0, 1, 1], [], []>} : vector<64x128xbf16>, vector<128x128xbf16>, vector<64x128xf32> -> vector<64x128xf32>
    %98 = arith.addf %80, %97 : vector<64x128xf32>
    %99 = arith.truncf %94 : vector<64x128xf32> to vector<64x128xbf16>
    %c640 = arith.constant 640 : index
    %c0_32 = arith.constant 0 : index
    %100 = vector.load %arg1[%c640, %c0_32] : memref<1920x128xbf16, #tpu.memory_space<vmem>>, vector<128x128xbf16>
    %cst_33 = arith.constant dense<0.000000e+00> : vector<64x128xf32>
    %101 = tpu.matmul %99, %100, %cst_33 {dimension_numbers = #tpu.dot_dimension_numbers<[1], [0], [0], [1], [0, 0, 1, 1], [], []>} : vector<64x128xbf16>, vector<128x128xbf16>, vector<64x128xf32> -> vector<64x128xf32>
    %102 = arith.addf %98, %101 : vector<64x128xf32>
    %103 = vector.broadcast %75 : vector<1x128xf32> to vector<64x128xf32>
    %104 = arith.addf %102, %103 : vector<64x128xf32>
    %cst_34 = arith.constant 0.000000e+00 : f32
    %105 = vector.broadcast %cst_34 : f32 to vector<64x128xf32>
    %106 = arith.maximumf %104, %105 : vector<64x128xf32>
    %cst_35 = arith.constant dense<0.000000e+00> : vector<128xf32>
    %107 = vector.multi_reduction <add>, %106, %cst_35 [0] : vector<64x128xf32> to vector<128xf32>
    %108 = vector.shape_cast %107 : vector<128xf32> to vector<1x128xf32>
    %cst_36 = arith.constant 6.400000e+01 : f32
    %109 = vector.broadcast %cst_36 : f32 to vector<1x128xf32>
    %110 = arith.divf %108, %109 : vector<1x128xf32>
    %111 = vector.broadcast %110 : vector<1x128xf32> to vector<64x128xf32>
    %112 = arith.subf %106, %111 : vector<64x128xf32>
    %113 = arith.mulf %112, %112 : vector<64x128xf32>
    %cst_37 = arith.constant dense<0.000000e+00> : vector<128xf32>
    %114 = vector.multi_reduction <add>, %113, %cst_37 [0] : vector<64x128xf32> to vector<128xf32>
    %115 = vector.shape_cast %114 : vector<128xf32> to vector<1x128xf32>
    %cst_38 = arith.constant 6.400000e+01 : f32
    %116 = vector.broadcast %cst_38 : f32 to vector<1x128xf32>
    %117 = arith.divf %115, %116 : vector<1x128xf32>
    %cst_39 = arith.constant 9.99999974E-6 : f32
    %118 = vector.broadcast %cst_39 : f32 to vector<1x128xf32>
    %119 = arith.addf %117, %118 : vector<1x128xf32>
    %120 = math.rsqrt %119 : vector<1x128xf32>
    %121 = arith.mulf %76, %120 : vector<1x128xf32>
    %122 = arith.mulf %110, %121 : vector<1x128xf32>
    %123 = arith.subf %77, %122 : vector<1x128xf32>
    %124 = vector.broadcast %121 : vector<1x128xf32> to vector<64x128xf32>
    %125 = arith.mulf %106, %124 : vector<64x128xf32>
    %126 = vector.broadcast %123 : vector<1x128xf32> to vector<64x128xf32>
    %127 = arith.addf %125, %126 : vector<64x128xf32>
    %c2 = arith.constant 2 : index
    %c0_40 = arith.constant 0 : index
    %c0_41 = arith.constant 0 : index
    %128 = vector.load %arg2[%c2, %c0_40, %c0_41] : memref<5x8x128xf32, #tpu.memory_space<vmem>>, vector<1x8x128xf32>
    %129 = vector.shape_cast %128 : vector<1x8x128xf32> to vector<8x128xf32>
    %130 = vector.extract_strided_slice %129 {offsets = [0, 0], sizes = [1, 128], strides = [1, 1]} : vector<8x128xf32> to vector<1x128xf32>
    %131 = vector.extract_strided_slice %129 {offsets = [1, 0], sizes = [1, 128], strides = [1, 1]} : vector<8x128xf32> to vector<1x128xf32>
    %132 = vector.extract_strided_slice %129 {offsets = [2, 0], sizes = [1, 128], strides = [1, 1]} : vector<8x128xf32> to vector<1x128xf32>
    %133 = arith.truncf %127 : vector<64x128xf32> to vector<64x128xbf16>
    %c896 = arith.constant 896 : index
    %c0_42 = arith.constant 0 : index
    %134 = vector.load %arg1[%c896, %c0_42] : memref<1920x128xbf16, #tpu.memory_space<vmem>>, vector<128x128xbf16>
    %cst_43 = arith.constant dense<0.000000e+00> : vector<64x128xf32>
    %135 = tpu.matmul %133, %134, %cst_43 {dimension_numbers = #tpu.dot_dimension_numbers<[1], [0], [0], [1], [0, 0, 1, 1], [], []>} : vector<64x128xbf16>, vector<128x128xbf16>, vector<64x128xf32> -> vector<64x128xf32>
    %c4_i32 = arith.constant 4 : i32
    %136 = vector.broadcast %c4_i32 : i32 to vector<64x1xi32>
    %137 = arith.cmpi sge, %17, %136 : vector<64x1xi32>
    %c4_i32_44 = arith.constant 4 : i32
    %138 = tpu.dynamic_rotate %127 by %c4_i32_44 dim 0 : vector<64x128xf32>, i32 -> vector<64x128xf32>
    %cst_45 = arith.constant 0.000000e+00 : f32
    %139 = vector.shape_cast %137 : vector<64x1xi1> to vector<64x1xi1>
    %140 = vector.broadcast %139 : vector<64x1xi1> to vector<64x128xi1>
    %141 = vector.broadcast %cst_45 : f32 to vector<64x128xf32>
    %142 = arith.select %140, %138, %141 : vector<64x128xi1>, vector<64x128xf32>
    %c28_i32 = arith.constant 28 : i32
    %143 = vector.broadcast %c28_i32 : i32 to vector<64x1xi32>
    %144 = arith.cmpi slt, %17, %143 : vector<64x1xi32>
    %c60_i32 = arith.constant 60 : i32
    %145 = tpu.dynamic_rotate %127 by %c60_i32 dim 0 : vector<64x128xf32>, i32 -> vector<64x128xf32>
    %cst_46 = arith.constant 0.000000e+00 : f32
    %146 = vector.shape_cast %144 : vector<64x1xi1> to vector<64x1xi1>
    %147 = vector.broadcast %146 : vector<64x1xi1> to vector<64x128xi1>
    %148 = vector.broadcast %cst_46 : f32 to vector<64x128xf32>
    %149 = arith.select %147, %145, %148 : vector<64x128xi1>, vector<64x128xf32>
    %150 = arith.truncf %142 : vector<64x128xf32> to vector<64x128xbf16>
    %c768 = arith.constant 768 : index
    %c0_47 = arith.constant 0 : index
    %151 = vector.load %arg1[%c768, %c0_47] : memref<1920x128xbf16, #tpu.memory_space<vmem>>, vector<128x128xbf16>
    %cst_48 = arith.constant dense<0.000000e+00> : vector<64x128xf32>
    %152 = tpu.matmul %150, %151, %cst_48 {dimension_numbers = #tpu.dot_dimension_numbers<[1], [0], [0], [1], [0, 0, 1, 1], [], []>} : vector<64x128xbf16>, vector<128x128xbf16>, vector<64x128xf32> -> vector<64x128xf32>
    %153 = arith.addf %135, %152 : vector<64x128xf32>
    %154 = arith.truncf %149 : vector<64x128xf32> to vector<64x128xbf16>
    %c1024 = arith.constant 1024 : index
    %c0_49 = arith.constant 0 : index
    %155 = vector.load %arg1[%c1024, %c0_49] : memref<1920x128xbf16, #tpu.memory_space<vmem>>, vector<128x128xbf16>
    %cst_50 = arith.constant dense<0.000000e+00> : vector<64x128xf32>
    %156 = tpu.matmul %154, %155, %cst_50 {dimension_numbers = #tpu.dot_dimension_numbers<[1], [0], [0], [1], [0, 0, 1, 1], [], []>} : vector<64x128xbf16>, vector<128x128xbf16>, vector<64x128xf32> -> vector<64x128xf32>
    %157 = arith.addf %153, %156 : vector<64x128xf32>
    %158 = vector.broadcast %130 : vector<1x128xf32> to vector<64x128xf32>
    %159 = arith.addf %157, %158 : vector<64x128xf32>
    %cst_51 = arith.constant 0.000000e+00 : f32
    %160 = vector.broadcast %cst_51 : f32 to vector<64x128xf32>
    %161 = arith.maximumf %159, %160 : vector<64x128xf32>
    %cst_52 = arith.constant dense<0.000000e+00> : vector<128xf32>
    %162 = vector.multi_reduction <add>, %161, %cst_52 [0] : vector<64x128xf32> to vector<128xf32>
    %163 = vector.shape_cast %162 : vector<128xf32> to vector<1x128xf32>
    %cst_53 = arith.constant 6.400000e+01 : f32
    %164 = vector.broadcast %cst_53 : f32 to vector<1x128xf32>
    %165 = arith.divf %163, %164 : vector<1x128xf32>
    %166 = vector.broadcast %165 : vector<1x128xf32> to vector<64x128xf32>
    %167 = arith.subf %161, %166 : vector<64x128xf32>
    %168 = arith.mulf %167, %167 : vector<64x128xf32>
    %cst_54 = arith.constant dense<0.000000e+00> : vector<128xf32>
    %169 = vector.multi_reduction <add>, %168, %cst_54 [0] : vector<64x128xf32> to vector<128xf32>
    %170 = vector.shape_cast %169 : vector<128xf32> to vector<1x128xf32>
    %cst_55 = arith.constant 6.400000e+01 : f32
    %171 = vector.broadcast %cst_55 : f32 to vector<1x128xf32>
    %172 = arith.divf %170, %171 : vector<1x128xf32>
    %cst_56 = arith.constant 9.99999974E-6 : f32
    %173 = vector.broadcast %cst_56 : f32 to vector<1x128xf32>
    %174 = arith.addf %172, %173 : vector<1x128xf32>
    %175 = math.rsqrt %174 : vector<1x128xf32>
    %176 = arith.mulf %131, %175 : vector<1x128xf32>
    %177 = arith.mulf %165, %176 : vector<1x128xf32>
    %178 = arith.subf %132, %177 : vector<1x128xf32>
    %179 = vector.broadcast %176 : vector<1x128xf32> to vector<64x128xf32>
    %180 = arith.mulf %161, %179 : vector<64x128xf32>
    %181 = vector.broadcast %178 : vector<1x128xf32> to vector<64x128xf32>
    %182 = arith.addf %180, %181 : vector<64x128xf32>
    %c3 = arith.constant 3 : index
    %c0_57 = arith.constant 0 : index
    %c0_58 = arith.constant 0 : index
    %183 = vector.load %arg2[%c3, %c0_57, %c0_58] : memref<5x8x128xf32, #tpu.memory_space<vmem>>, vector<1x8x128xf32>
    %184 = vector.shape_cast %183 : vector<1x8x128xf32> to vector<8x128xf32>
    %185 = vector.extract_strided_slice %184 {offsets = [0, 0], sizes = [1, 128], strides = [1, 1]} : vector<8x128xf32> to vector<1x128xf32>
    %186 = vector.extract_strided_slice %184 {offsets = [1, 0], sizes = [1, 128], strides = [1, 1]} : vector<8x128xf32> to vector<1x128xf32>
    %187 = vector.extract_strided_slice %184 {offsets = [2, 0], sizes = [1, 128], strides = [1, 1]} : vector<8x128xf32> to vector<1x128xf32>
    %188 = arith.truncf %182 : vector<64x128xf32> to vector<64x128xbf16>
    %c1280 = arith.constant 1280 : index
    %c0_59 = arith.constant 0 : index
    %189 = vector.load %arg1[%c1280, %c0_59] : memref<1920x128xbf16, #tpu.memory_space<vmem>>, vector<128x128xbf16>
    %cst_60 = arith.constant dense<0.000000e+00> : vector<64x128xf32>
    %190 = tpu.matmul %188, %189, %cst_60 {dimension_numbers = #tpu.dot_dimension_numbers<[1], [0], [0], [1], [0, 0, 1, 1], [], []>} : vector<64x128xbf16>, vector<128x128xbf16>, vector<64x128xf32> -> vector<64x128xf32>
    %c8_i32 = arith.constant 8 : i32
    %191 = vector.broadcast %c8_i32 : i32 to vector<64x1xi32>
    %192 = arith.cmpi sge, %17, %191 : vector<64x1xi32>
    %c8_i32_61 = arith.constant 8 : i32
    %193 = tpu.dynamic_rotate %182 by %c8_i32_61 dim 0 : vector<64x128xf32>, i32 -> vector<64x128xf32>
    %cst_62 = arith.constant 0.000000e+00 : f32
    %194 = vector.shape_cast %192 : vector<64x1xi1> to vector<64x1xi1>
    %195 = vector.broadcast %194 : vector<64x1xi1> to vector<64x128xi1>
    %196 = vector.broadcast %cst_62 : f32 to vector<64x128xf32>
    %197 = arith.select %195, %193, %196 : vector<64x128xi1>, vector<64x128xf32>
    %c24_i32 = arith.constant 24 : i32
    %198 = vector.broadcast %c24_i32 : i32 to vector<64x1xi32>
    %199 = arith.cmpi slt, %17, %198 : vector<64x1xi32>
    %c56_i32 = arith.constant 56 : i32
    %200 = tpu.dynamic_rotate %182 by %c56_i32 dim 0 : vector<64x128xf32>, i32 -> vector<64x128xf32>
    %cst_63 = arith.constant 0.000000e+00 : f32
    %201 = vector.shape_cast %199 : vector<64x1xi1> to vector<64x1xi1>
    %202 = vector.broadcast %201 : vector<64x1xi1> to vector<64x128xi1>
    %203 = vector.broadcast %cst_63 : f32 to vector<64x128xf32>
    %204 = arith.select %202, %200, %203 : vector<64x128xi1>, vector<64x128xf32>
    %205 = arith.truncf %197 : vector<64x128xf32> to vector<64x128xbf16>
    %c1152 = arith.constant 1152 : index
    %c0_64 = arith.constant 0 : index
    %206 = vector.load %arg1[%c1152, %c0_64] : memref<1920x128xbf16, #tpu.memory_space<vmem>>, vector<128x128xbf16>
    %cst_65 = arith.constant dense<0.000000e+00> : vector<64x128xf32>
    %207 = tpu.matmul %205, %206, %cst_65 {dimension_numbers = #tpu.dot_dimension_numbers<[1], [0], [0], [1], [0, 0, 1, 1], [], []>} : vector<64x128xbf16>, vector<128x128xbf16>, vector<64x128xf32> -> vector<64x128xf32>
    %208 = arith.addf %190, %207 : vector<64x128xf32>
    %209 = arith.truncf %204 : vector<64x128xf32> to vector<64x128xbf16>
    %c1408 = arith.constant 1408 : index
    %c0_66 = arith.constant 0 : index
    %210 = vector.load %arg1[%c1408, %c0_66] : memref<1920x128xbf16, #tpu.memory_space<vmem>>, vector<128x128xbf16>
    %cst_67 = arith.constant dense<0.000000e+00> : vector<64x128xf32>
    %211 = tpu.matmul %209, %210, %cst_67 {dimension_numbers = #tpu.dot_dimension_numbers<[1], [0], [0], [1], [0, 0, 1, 1], [], []>} : vector<64x128xbf16>, vector<128x128xbf16>, vector<64x128xf32> -> vector<64x128xf32>
    %212 = arith.addf %208, %211 : vector<64x128xf32>
    %213 = vector.broadcast %185 : vector<1x128xf32> to vector<64x128xf32>
    %214 = arith.addf %212, %213 : vector<64x128xf32>
    %cst_68 = arith.constant 0.000000e+00 : f32
    %215 = vector.broadcast %cst_68 : f32 to vector<64x128xf32>
    %216 = arith.maximumf %214, %215 : vector<64x128xf32>
    %cst_69 = arith.constant dense<0.000000e+00> : vector<128xf32>
    %217 = vector.multi_reduction <add>, %216, %cst_69 [0] : vector<64x128xf32> to vector<128xf32>
    %218 = vector.shape_cast %217 : vector<128xf32> to vector<1x128xf32>
    %cst_70 = arith.constant 6.400000e+01 : f32
    %219 = vector.broadcast %cst_70 : f32 to vector<1x128xf32>
    %220 = arith.divf %218, %219 : vector<1x128xf32>
    %221 = vector.broadcast %220 : vector<1x128xf32> to vector<64x128xf32>
    %222 = arith.subf %216, %221 : vector<64x128xf32>
    %223 = arith.mulf %222, %222 : vector<64x128xf32>
    %cst_71 = arith.constant dense<0.000000e+00> : vector<128xf32>
    %224 = vector.multi_reduction <add>, %223, %cst_71 [0] : vector<64x128xf32> to vector<128xf32>
    %225 = vector.shape_cast %224 : vector<128xf32> to vector<1x128xf32>
    %cst_72 = arith.constant 6.400000e+01 : f32
    %226 = vector.broadcast %cst_72 : f32 to vector<1x128xf32>
    %227 = arith.divf %225, %226 : vector<1x128xf32>
    %cst_73 = arith.constant 9.99999974E-6 : f32
    %228 = vector.broadcast %cst_73 : f32 to vector<1x128xf32>
    %229 = arith.addf %227, %228 : vector<1x128xf32>
    %230 = math.rsqrt %229 : vector<1x128xf32>
    %231 = arith.mulf %186, %230 : vector<1x128xf32>
    %232 = arith.mulf %220, %231 : vector<1x128xf32>
    %233 = arith.subf %187, %232 : vector<1x128xf32>
    %234 = vector.broadcast %231 : vector<1x128xf32> to vector<64x128xf32>
    %235 = arith.mulf %216, %234 : vector<64x128xf32>
    %236 = vector.broadcast %233 : vector<1x128xf32> to vector<64x128xf32>
    %237 = arith.addf %235, %236 : vector<64x128xf32>
    %c4 = arith.constant 4 : index
    %c0_74 = arith.constant 0 : index
    %c0_75 = arith.constant 0 : index
    %238 = vector.load %arg2[%c4, %c0_74, %c0_75] : memref<5x8x128xf32, #tpu.memory_space<vmem>>, vector<1x8x128xf32>
    %239 = vector.shape_cast %238 : vector<1x8x128xf32> to vector<8x128xf32>
    %240 = vector.extract_strided_slice %239 {offsets = [0, 0], sizes = [1, 128], strides = [1, 1]} : vector<8x128xf32> to vector<1x128xf32>
    %241 = vector.extract_strided_slice %239 {offsets = [1, 0], sizes = [1, 128], strides = [1, 1]} : vector<8x128xf32> to vector<1x128xf32>
    %242 = vector.extract_strided_slice %239 {offsets = [2, 0], sizes = [1, 128], strides = [1, 1]} : vector<8x128xf32> to vector<1x128xf32>
    %243 = arith.truncf %237 : vector<64x128xf32> to vector<64x128xbf16>
    %c1664 = arith.constant 1664 : index
    %c0_76 = arith.constant 0 : index
    %244 = vector.load %arg1[%c1664, %c0_76] : memref<1920x128xbf16, #tpu.memory_space<vmem>>, vector<128x128xbf16>
    %cst_77 = arith.constant dense<0.000000e+00> : vector<64x128xf32>
    %245 = tpu.matmul %243, %244, %cst_77 {dimension_numbers = #tpu.dot_dimension_numbers<[1], [0], [0], [1], [0, 0, 1, 1], [], []>} : vector<64x128xbf16>, vector<128x128xbf16>, vector<64x128xf32> -> vector<64x128xf32>
    %c16_i32 = arith.constant 16 : i32
    %246 = vector.broadcast %c16_i32 : i32 to vector<64x1xi32>
    %247 = arith.cmpi sge, %17, %246 : vector<64x1xi32>
    %c16_i32_78 = arith.constant 16 : i32
    %248 = tpu.dynamic_rotate %237 by %c16_i32_78 dim 0 : vector<64x128xf32>, i32 -> vector<64x128xf32>
    %cst_79 = arith.constant 0.000000e+00 : f32
    %249 = vector.shape_cast %247 : vector<64x1xi1> to vector<64x1xi1>
    %250 = vector.broadcast %249 : vector<64x1xi1> to vector<64x128xi1>
    %251 = vector.broadcast %cst_79 : f32 to vector<64x128xf32>
    %252 = arith.select %250, %248, %251 : vector<64x128xi1>, vector<64x128xf32>
    %c16_i32_80 = arith.constant 16 : i32
    %253 = vector.broadcast %c16_i32_80 : i32 to vector<64x1xi32>
    %254 = arith.cmpi slt, %17, %253 : vector<64x1xi32>
    %c48_i32 = arith.constant 48 : i32
    %255 = tpu.dynamic_rotate %237 by %c48_i32 dim 0 : vector<64x128xf32>, i32 -> vector<64x128xf32>
    %cst_81 = arith.constant 0.000000e+00 : f32
    %256 = vector.shape_cast %254 : vector<64x1xi1> to vector<64x1xi1>
    %257 = vector.broadcast %256 : vector<64x1xi1> to vector<64x128xi1>
    %258 = vector.broadcast %cst_81 : f32 to vector<64x128xf32>
    %259 = arith.select %257, %255, %258 : vector<64x128xi1>, vector<64x128xf32>
    %260 = arith.truncf %252 : vector<64x128xf32> to vector<64x128xbf16>
    %c1536 = arith.constant 1536 : index
    %c0_82 = arith.constant 0 : index
    %261 = vector.load %arg1[%c1536, %c0_82] : memref<1920x128xbf16, #tpu.memory_space<vmem>>, vector<128x128xbf16>
    %cst_83 = arith.constant dense<0.000000e+00> : vector<64x128xf32>
    %262 = tpu.matmul %260, %261, %cst_83 {dimension_numbers = #tpu.dot_dimension_numbers<[1], [0], [0], [1], [0, 0, 1, 1], [], []>} : vector<64x128xbf16>, vector<128x128xbf16>, vector<64x128xf32> -> vector<64x128xf32>
    %263 = arith.addf %245, %262 : vector<64x128xf32>
    %264 = arith.truncf %259 : vector<64x128xf32> to vector<64x128xbf16>
    %c1792 = arith.constant 1792 : index
    %c0_84 = arith.constant 0 : index
    %265 = vector.load %arg1[%c1792, %c0_84] : memref<1920x128xbf16, #tpu.memory_space<vmem>>, vector<128x128xbf16>
    %cst_85 = arith.constant dense<0.000000e+00> : vector<64x128xf32>
    %266 = tpu.matmul %264, %265, %cst_85 {dimension_numbers = #tpu.dot_dimension_numbers<[1], [0], [0], [1], [0, 0, 1, 1], [], []>} : vector<64x128xbf16>, vector<128x128xbf16>, vector<64x128xf32> -> vector<64x128xf32>
    %267 = arith.addf %263, %266 : vector<64x128xf32>
    %268 = vector.broadcast %240 : vector<1x128xf32> to vector<64x128xf32>
    %269 = arith.addf %267, %268 : vector<64x128xf32>
    %cst_86 = arith.constant 0.000000e+00 : f32
    %270 = vector.broadcast %cst_86 : f32 to vector<64x128xf32>
    %271 = arith.maximumf %269, %270 : vector<64x128xf32>
    %cst_87 = arith.constant dense<0.000000e+00> : vector<128xf32>
    %272 = vector.multi_reduction <add>, %271, %cst_87 [0] : vector<64x128xf32> to vector<128xf32>
    %273 = vector.shape_cast %272 : vector<128xf32> to vector<1x128xf32>
    %cst_88 = arith.constant 6.400000e+01 : f32
    %274 = vector.broadcast %cst_88 : f32 to vector<1x128xf32>
    %275 = arith.divf %273, %274 : vector<1x128xf32>
    %276 = vector.broadcast %275 : vector<1x128xf32> to vector<64x128xf32>
    %277 = arith.subf %271, %276 : vector<64x128xf32>
    %278 = arith.mulf %277, %277 : vector<64x128xf32>
    %cst_89 = arith.constant dense<0.000000e+00> : vector<128xf32>
    %279 = vector.multi_reduction <add>, %278, %cst_89 [0] : vector<64x128xf32> to vector<128xf32>
    %280 = vector.shape_cast %279 : vector<128xf32> to vector<1x128xf32>
    %cst_90 = arith.constant 6.400000e+01 : f32
    %281 = vector.broadcast %cst_90 : f32 to vector<1x128xf32>
    %282 = arith.divf %280, %281 : vector<1x128xf32>
    %cst_91 = arith.constant 9.99999974E-6 : f32
    %283 = vector.broadcast %cst_91 : f32 to vector<1x128xf32>
    %284 = arith.addf %282, %283 : vector<1x128xf32>
    %285 = math.rsqrt %284 : vector<1x128xf32>
    %286 = arith.mulf %241, %285 : vector<1x128xf32>
    %287 = arith.mulf %275, %286 : vector<1x128xf32>
    %288 = arith.subf %242, %287 : vector<1x128xf32>
    %289 = vector.broadcast %286 : vector<1x128xf32> to vector<64x128xf32>
    %290 = arith.mulf %271, %289 : vector<64x128xf32>
    %291 = vector.broadcast %288 : vector<1x128xf32> to vector<64x128xf32>
    %292 = arith.addf %290, %291 : vector<64x128xf32>
    %c0_92 = arith.constant 0 : index
    %c0_93 = arith.constant 0 : index
    %293 = vector.load %arg3[%c0_92, %c0_93] : memref<64x128xf32, #tpu.memory_space<vmem>>, vector<64x128xf32>
    tpu.vector_store %arg3[%c0_92, %c0_93], %292 {strides = array<i32>} : memref<64x128xf32, #tpu.memory_space<vmem>>, vector<64x128xf32>,
    return
  }
}

</mosaic_0001>

<llo_original>
// kernel: tpu_custom_call.1
$region0: #{tpu_custom_call.1}
  #allocation0 [shape = 'u32[]', space=smem, size = 0x4, offset = 0x4, fixed_abs, tag = 'smem constant byte address 0x4 - core index']
  #allocation1 [shape = 'u32[72,128]{1,0:T(1,128)}', space=vmem, size = 0x9000, scoped, tag = 'internal scratch']
  %s0 = inlined_call_operand.hbm [shape: f32[64,128], index: 0, kind: input, shape index: {}]
  %s1 = inlined_call_operand.hbm [shape: bf16[1920,128], index: 1, kind: input, shape index: {}]
  %s2 = inlined_call_operand.hbm [shape: f32[5,8,128], index: 2, kind: input, shape index: {}]
  %s3 = inlined_call_operand.hbm [shape: f32[64,128], index: 3, kind: output, shape index: {}]
  %s4 = sld [smem:[#allocation0]]
  $region34: #{tpu_custom_call.1} parent=0
    _
  %s6 = ssub.s32 1, %s4
  %s7 = scalar_select 0, %s6, %s4
  $region1: #{tpu_custom_call.1} parent=0
    #allocation2 [shape = 'u8[32768]{0}', space=vmem, size = 0x8000, scoped, tag = 'input window, operand 0, single buffered']
    #allocation3 [shape = 's32[1]{0}', space=sflag, size = 0x4, scoped, tag = 'scoped memory for tpu_custom_call.1']
    #allocation4 [shape = 's32[1]{0}', space=sflag, size = 0x4, scoped, tag = 'scoped memory for tpu_custom_call.1']
    #allocation5 [shape = 'u8[491520]{0}', space=vmem, size = 0x78000, scoped, tag = 'input window, operand 1, single buffered']
    #allocation6 [shape = 's32[1]{0}', space=sflag, size = 0x4, scoped, tag = 'scoped memory for tpu_custom_call.1']
    #allocation7 [shape = 'u8[20480]{0}', space=vmem, size = 0x5000, scoped, tag = 'input window, operand 2, single buffered']
    #allocation8 [shape = 'u8[32768]{0}', space=vmem, size = 0x8000, scoped, tag = 'output window, operand 0, single buffered']
    %8 = vsyncpa [#allocation3], 0
    %9 = vsyncpa [#allocation6], 0
    %10 = vsyncpa [#allocation4], 0
    // Predicated region
    $region2: #{tpu_custom_call.1} parent=1 // pred_check
      _
    $region3: #{tpu_custom_call.1} parent=1 // pred_check_branch
      %12 = sbr.rel (0) target = $region5
    $region4: #{tpu_custom_call.1} parent=1 // pred_region
      %14 = vsyncadd [#allocation3], 0
      %s15 = sshll.u32 %s0, 4
      %s16 = int_to_ptr.hbm [resolvable:$true] %s15
      %s17 = sshll.u32 [#allocation2], 4
      %s18 = int_to_ptr.vmem [resolvable:$true] %s17
      %23 = dma.hbm_to_vmem [thread:$0]  %s16, 1024, %s18, [#allocation3], 128, 128, 8
    $region5: #{tpu_custom_call.1} parent=1 // pred_fallthru
      _
    // Predicated region
    $region6: #{tpu_custom_call.1} parent=1 // pred_check
      _
    $region7: #{tpu_custom_call.1} parent=1 // pred_check_branch
      %25 = sbr.rel (0) target = $region9
    $region8: #{tpu_custom_call.1} parent=1 // pred_region
      %27 = vsyncadd [#allocation6], 0
      %s28 = sshll.u32 %s1, 4
      %s29 = int_to_ptr.hbm [resolvable:$true] %s28
      %s30 = sshll.u32 [#allocation5], 4
      %s31 = int_to_ptr.vmem [resolvable:$true] %s30
      %36 = dma.hbm_to_vmem [thread:$0]  %s29, 15360, %s31, [#allocation6], 64, 64, 4
    $region9: #{tpu_custom_call.1} parent=1 // pred_fallthru
      _
    // Predicated region
    $region10: #{tpu_custom_call.1} parent=1 // pred_check
      _
    $region11: #{tpu_custom_call.1} parent=1 // pred_check_branch
      %38 = sbr.rel (0) target = $region13
    $region12: #{tpu_custom_call.1} parent=1 // pred_region
      %40 = vsyncadd [#allocation6], 0
      %s41 = sshll.u32 %s2, 4
      %s42 = int_to_ptr.hbm [resolvable:$true] %s41
      %s43 = sshll.u32 [#allocation7], 4
      %s44 = int_to_ptr.vmem [resolvable:$true] %s43
      %49 = dma.hbm_to_vmem [thread:$0]  %s42, 640, %s44, [#allocation6], 128, 128, 8
    $region13: #{tpu_custom_call.1} parent=1 // pred_fallthru
      _
    // Predicated region
    $region14: #{tpu_custom_call.1} parent=1 // pred_check
      _
    $region15: #{tpu_custom_call.1} parent=1 // pred_check_branch
      %51 = sbr.rel (0) target = $region17
    $region16: #{tpu_custom_call.1} parent=1 // pred_region
      %53 = dma.done [#allocation3], 1024
    $region17: #{tpu_custom_call.1} parent=1 // pred_fallthru
      _
    // Predicated region
    $region18: #{tpu_custom_call.1} parent=1 // pred_check
      _
    $region19: #{tpu_custom_call.1} parent=1 // pred_check_branch
      %55 = sbr.rel (0) target = $region21
    $region20: #{tpu_custom_call.1} parent=1 // pred_region
      %57 = dma.done [#allocation6], 15360
    $region21: #{tpu_custom_call.1} parent=1 // pred_fallthru
      _
    // Predicated region
    $region22: #{tpu_custom_call.1} parent=1 // pred_check
      _
    $region23: #{tpu_custom_call.1} parent=1 // pred_check_branch
      %59 = sbr.rel (0) target = $region25
    $region24: #{tpu_custom_call.1} parent=1 // pred_region
      %61 = dma.done [#allocation6], 640
    $region25: #{tpu_custom_call.1} parent=1 // pred_fallthru
      _
    %v62 = vld [vmem:[#allocation2] sm:$0xff]
    %v63 = vld [vmem:[#allocation2 + $0x8] sm:$0xff]
    %v64 = vld [vmem:[#allocation2 + $0x10] sm:$0xff]
    %v65 = vld [vmem:[#allocation2 + $0x18] sm:$0xff]
    %v66 = vld [vmem:[#allocation2 + $0x20] sm:$0xff]
    %v67 = vld [vmem:[#allocation2 + $0x28] sm:$0xff]
    %v68 = vld [vmem:[#allocation2 + $0x30] sm:$0xff]
    %v69 = vld [vmem:[#allocation2 + $0x38] sm:$0xff]
    %v70 = vlaneseq
    %v71 = vshrl.u32 %v70, 7
    %v72 = vadd.s32 %v71, 8
    %v73 = vadd.s32 %v71, 16
    %v74 = vadd.s32 %v71, 24
    %v75 = vadd.s32 %v71, 32
    %v76 = vadd.s32 %v71, 40
    %v77 = vadd.s32 %v71, 48
    %v78 = vadd.s32 %v71, 56
    %vm79 = vcmp.lt.s32.totalorder %v71, 0
    %v80 = vsub.s32 0, %v71
    %v81 = vsel %vm79, %v80, %v71
    %v82 = vshrl.u32 %v81, 5
    %v83 = vand.u32 %v81, 31
    %v84 = vsub.s32 0, %v83
    %v85 = vsel %vm79, %v84, %v83
    %vm86 = vcmp.lt.s32.totalorder %v72, 0
    %v87 = vsub.s32 0, %v72
    %v88 = vsel %vm86, %v87, %v72
    %v89 = vshrl.u32 %v88, 5
    %v90 = vand.u32 %v88, 31
    %v91 = vsub.s32 0, %v90
    %v92 = vsel %vm86, %v91, %v90
    %vm93 = vcmp.lt.s32.totalorder %v73, 0
    %v94 = vsub.s32 0, %v73
    %v95 = vsel %vm93, %v94, %v73
    %v96 = vshrl.u32 %v95, 5
    %v97 = vand.u32 %v95, 31
    %v98 = vsub.s32 0, %v97
    %v99 = vsel %vm93, %v98, %v97
    %vm100 = vcmp.lt.s32.totalorder %v74, 0
    %v101 = vsub.s32 0, %v74
    %v102 = vsel %vm100, %v101, %v74
    %v103 = vshrl.u32 %v102, 5
    %v104 = vand.u32 %v102, 31
    %v105 = vsub.s32 0, %v104
    %v106 = vsel %vm100, %v105, %v104
    %vm107 = vcmp.lt.s32.totalorder %v75, 0
    %v108 = vsub.s32 0, %v75
    %v109 = vsel %vm107, %v108, %v75
    %v110 = vshrl.u32 %v109, 5
    %v111 = vand.u32 %v109, 31
    %v112 = vsub.s32 0, %v111
    %v113 = vsel %vm107, %v112, %v111
    %vm114 = vcmp.lt.s32.totalorder %v76, 0
    %v115 = vsub.s32 0, %v76
    %v116 = vsel %vm114, %v115, %v76
    %v117 = vshrl.u32 %v116, 5
    %v118 = vand.u32 %v116, 31
    %v119 = vsub.s32 0, %v118
    %v120 = vsel %vm114, %v119, %v118
    %vm121 = vcmp.lt.s32.totalorder %v77, 0
    %v122 = vsub.s32 0, %v77
    %v123 = vsel %vm121, %v122, %v77
    %v124 = vshrl.u32 %v123, 5
    %v125 = vand.u32 %v123, 31
    %v126 = vsub.s32 0, %v125
    %v127 = vsel %vm121, %v126, %v125
    %vm128 = vcmp.lt.s32.totalorder %v78, 0
    %v129 = vsub.s32 0, %v78
    %v130 = vsel %vm128, %v129, %v78
    %v131 = vshrl.u32 %v130, 5
    %v132 = vand.u32 %v130, 31
    %v133 = vsub.s32 0, %v132
    %v134 = vsel %vm128, %v133, %v132
    %vm135 = vcmp.ne.s32.totalorder %v85, 0
    %vm136 = vcmp.ne.s32.totalorder %v92, 0
    %vm137 = vcmp.ne.s32.totalorder %v99, 0
    %vm138 = vcmp.ne.s32.totalorder %v106, 0
    %vm139 = vcmp.ne.s32.totalorder %v113, 0
    %vm140 = vcmp.ne.s32.totalorder %v120, 0
    %vm141 = vcmp.ne.s32.totalorder %v127, 0
    %vm142 = vcmp.ne.s32.totalorder %v134, 0
    %vm143 = vcmp.lt.s32.totalorder %v85, 0
    %vm144 = vcmp.lt.s32.totalorder %v92, 0
    %vm145 = vcmp.lt.s32.totalorder %v99, 0
    %vm146 = vcmp.lt.s32.totalorder %v106, 0
    %vm147 = vcmp.lt.s32.totalorder %v113, 0
    %vm148 = vcmp.lt.s32.totalorder %v120, 0
    %vm149 = vcmp.lt.s32.totalorder %v127, 0
    %vm150 = vcmp.lt.s32.totalorder %v134, 0
    %vm151 = vmand %vm143, %vm135
    %vm152 = vmand %vm144, %vm136
    %vm153 = vmand %vm145, %vm137
    %vm154 = vmand %vm146, %vm138
    %vm155 = vmand %vm147, %vm139
    %vm156 = vmand %vm148, %vm140
    %vm157 = vmand %vm149, %vm141
    %vm158 = vmand %vm150, %vm142
    %v159 = vadd.s32 %v85, 32
    %v160 = vadd.s32 %v92, 32
    %v161 = vadd.s32 %v99, 32
    %v162 = vadd.s32 %v106, 32
    %v163 = vadd.s32 %v113, 32
    %v164 = vadd.s32 %v120, 32
    %v165 = vadd.s32 %v127, 32
    %v166 = vadd.s32 %v134, 32
    %v167 = vsel %vm151, %v159, %v85
    %v168 = vsel %vm152, %v160, %v92
    %v169 = vsel %vm153, %v161, %v99
    %v170 = vsel %vm154, %v162, %v106
    %v171 = vsel %vm155, %v163, %v113
    %v172 = vsel %vm156, %v164, %v120
    %v173 = vsel %vm157, %v165, %v127
    %v174 = vsel %vm158, %v166, %v134
    %v175 = vld [vmem:[#allocation7] sm:$0xff]
    %v176 = vpack.c.bf16 %v63, %v62
    %v177 = vpack.c.bf16 %v65, %v64
    %v178 = vpack.c.bf16 %v67, %v66
    %v179 = vpack.c.bf16 %v69, %v68
    %v180 = vld [vmem:[#allocation5 + $0x40] sm:$0xf]
    %v181 = vld [vmem:[#allocation5 + $0x44] sm:$0xf]
    %v182 = vld [vmem:[#allocation5 + $0x48] sm:$0xf]
    %v183 = vld [vmem:[#allocation5 + $0x4c] sm:$0xf]
    %v184 = vld [vmem:[#allocation5 + $0x50] sm:$0xf]
    %v185 = vld [vmem:[#allocation5 + $0x54] sm:$0xf]
    %v186 = vld [vmem:[#allocation5 + $0x58] sm:$0xf]
    %v187 = vld [vmem:[#allocation5 + $0x5c] sm:$0xf]
    %v188 = vld [vmem:[#allocation5 + $0x60] sm:$0xf]
    %v189 = vld [vmem:[#allocation5 + $0x64] sm:$0xf]
    %v190 = vld [vmem:[#allocation5 + $0x68] sm:$0xf]
    %v191 = vld [vmem:[#allocation5 + $0x6c] sm:$0xf]
    %v192 = vld [vmem:[#allocation5 + $0x70] sm:$0xf]
    %v193 = vld [vmem:[#allocation5 + $0x74] sm:$0xf]
    %v194 = vld [vmem:[#allocation5 + $0x78] sm:$0xf]
    %v195 = vld [vmem:[#allocation5 + $0x7c] sm:$0xf]
    %vm196 = vcmp.ge.s32.totalorder %v167, 1
    %vm197 = vcmp.ge.s32.totalorder %v168, 1
    %vm198 = vcmp.ge.s32.totalorder %v169, 1
    %vm199 = vcmp.ge.s32.totalorder %v170, 1
    %vm200 = vcmp.ge.s32.totalorder %v171, 1
    %vm201 = vcmp.ge.s32.totalorder %v172, 1
    %vm202 = vcmp.ge.s32.totalorder %v173, 1
    %vm203 = vcmp.ge.s32.totalorder %v174, 1
    %v204 = vrot.slane %v62, 7
    %v205 = vrot.slane %v63, 7
    %v206 = vrot.slane %v64, 7
    %v207 = vrot.slane %v65, 7
    %v208 = vrot.slane %v66, 7
    %v209 = vrot.slane %v67, 7
    %v210 = vrot.slane %v68, 7
    %v211 = vrot.slane %v69, 7
    %vm212 = vcmp.lt.s32.totalorder %v71, 1
    %v213 = vsel %vm212, %v210, %v211
    %v214 = vsel %vm212, %v209, %v210
    %v215 = vsel %vm212, %v208, %v209
    %v216 = vsel %vm212, %v207, %v208
    %v217 = vsel %vm212, %v206, %v207
    %v218 = vsel %vm212, %v205, %v206
    %v219 = vsel %vm212, %v204, %v205
    %v220 = vsel %vm212, %v211, %v204
    %v221 = vsel %vm196, 1, 0
    %v222 = vsel %vm197, 1, 0
    %v223 = vsel %vm198, 1, 0
    %v224 = vsel %vm199, 1, 0
    %v225 = vsel %vm200, 1, 0
    %v226 = vsel %vm201, 1, 0
    %v227 = vsel %vm202, 1, 0
    %v228 = vsel %vm203, 1, 0
    %vm229 = vcmp.eq.s32.totalorder %v221, 1
    %vm230 = vcmp.eq.s32.totalorder %v222, 1
    %vm231 = vcmp.eq.s32.totalorder %v223, 1
    %vm232 = vcmp.eq.s32.totalorder %v224, 1
    %vm233 = vcmp.eq.s32.totalorder %v225, 1
    %vm234 = vcmp.eq.s32.totalorder %v226, 1
    %vm235 = vcmp.eq.s32.totalorder %v227, 1
    %vm236 = vcmp.eq.s32.totalorder %v228, 1
    %v237 = vsel %vm229, %v220, 0.0
    %v238 = vsel %vm230, %v219, 0.0
    %v239 = vsel %vm231, %v218, 0.0
    %v240 = vsel %vm232, %v217, 0.0
    %v241 = vsel %vm233, %v216, 0.0
    %v242 = vsel %vm234, %v215, 0.0
    %v243 = vsel %vm235, %v214, 0.0
    %v244 = vsel %vm236, %v213, 0.0
    %vm245 = vcmp.lt.s32.totalorder %v167, 31
    %vm246 = vcmp.lt.s32.totalorder %v168, 31
    %vm247 = vcmp.lt.s32.totalorder %v169, 31
    %vm248 = vcmp.lt.s32.totalorder %v170, 31
    %vm249 = vcmp.lt.s32.totalorder %v171, 31
    %vm250 = vcmp.lt.s32.totalorder %v172, 31
    %vm251 = vcmp.lt.s32.totalorder %v173, 31
    %vm252 = vcmp.lt.s32.totalorder %v174, 31
    %v253 = vrot.slane %v62, 1
    %v254 = vrot.slane %v63, 1
    %v255 = vrot.slane %v64, 1
    %v256 = vrot.slane %v65, 1
    %v257 = vrot.slane %v66, 1
    %v258 = vrot.slane %v67, 1
    %v259 = vrot.slane %v68, 1
    %v260 = vrot.slane %v69, 1
    %vm261 = vcmp.lt.s32.totalorder %v71, 7
    %v262 = vsel %vm261, %v259, %v260
    %v263 = vsel %vm261, %v258, %v259
    %v264 = vsel %vm261, %v257, %v258
    %v265 = vsel %vm261, %v256, %v257
    %v266 = vsel %vm261, %v255, %v256
    %v267 = vsel %vm261, %v254, %v255
    %v268 = vsel %vm261, %v253, %v254
    %v269 = vsel %vm261, %v260, %v253
    %v270 = vsel %vm245, 1, 0
    %v271 = vsel %vm246, 1, 0
    %v272 = vsel %vm247, 1, 0
    %v273 = vsel %vm248, 1, 0
    %v274 = vsel %vm249, 1, 0
    %v275 = vsel %vm250, 1, 0
    %v276 = vsel %vm251, 1, 0
    %v277 = vsel %vm252, 1, 0
    %vm278 = vcmp.eq.s32.totalorder %v270, 1
    %vm279 = vcmp.eq.s32.totalorder %v271, 1
    %vm280 = vcmp.eq.s32.totalorder %v272, 1
    %vm281 = vcmp.eq.s32.totalorder %v273, 1
    %vm282 = vcmp.eq.s32.totalorder %v274, 1
    %vm283 = vcmp.eq.s32.totalorder %v275, 1
    %vm284 = vcmp.eq.s32.totalorder %v276, 1
    %vm285 = vcmp.eq.s32.totalorder %v277, 1
    %v286 = vsel %vm278, %v268, 0.0
    %v287 = vsel %vm279, %v267, 0.0
    %v288 = vsel %vm280, %v266, 0.0
    %v289 = vsel %vm281, %v265, 0.0
    %v290 = vsel %vm282, %v264, 0.0
    %v291 = vsel %vm283, %v263, 0.0
    %v292 = vsel %vm284, %v262, 0.0
    %v293 = vsel %vm285, %v269, 0.0
    %v294 = vpack.c.bf16 %v238, %v237
    %v295 = vpack.c.bf16 %v240, %v239
    %v296 = vpack.c.bf16 %v242, %v241
    %v297 = vpack.c.bf16 %v244, %v243
    %v298 = vld [vmem:[#allocation5] sm:$0xf]
    %v299 = vld [vmem:[#allocation5 + $0x4] sm:$0xf]
    %v300 = vld [vmem:[#allocation5 + $0x8] sm:$0xf]
    %v301 = vld [vmem:[#allocation5 + $0xc] sm:$0xf]
    %v302 = vld [vmem:[#allocation5 + $0x10] sm:$0xf]
    %v303 = vld [vmem:[#allocation5 + $0x14] sm:$0xf]
    %v304 = vld [vmem:[#allocation5 + $0x18] sm:$0xf]
    %v305 = vld [vmem:[#allocation5 + $0x1c] sm:$0xf]
    %v306 = vld [vmem:[#allocation5 + $0x20] sm:$0xf]
    %v307 = vld [vmem:[#allocation5 + $0x24] sm:$0xf]
    %v308 = vld [vmem:[#allocation5 + $0x28] sm:$0xf]
    %v309 = vld [vmem:[#allocation5 + $0x2c] sm:$0xf]
    %v310 = vld [vmem:[#allocation5 + $0x30] sm:$0xf]
    %v311 = vld [vmem:[#allocation5 + $0x34] sm:$0xf]
    %v312 = vld [vmem:[#allocation5 + $0x38] sm:$0xf]
    %v313 = vld [vmem:[#allocation5 + $0x3c] sm:$0xf]
    %v330 = vunpack.c.l.b16 %v298
    %v331 = vunpack.c.l.b16 %v299
    %v332 = vunpack.c.l.b16 %v300
    %v333 = vunpack.c.l.b16 %v301
    %v334 = vunpack.c.l.b16 %v302
    %v335 = vunpack.c.l.b16 %v303
    %v336 = vunpack.c.l.b16 %v304
    %v337 = vunpack.c.l.b16 %v305
    %v338 = vunpack.c.l.b16 %v306
    %v339 = vunpack.c.l.b16 %v307
    %v340 = vunpack.c.l.b16 %v308
    %v341 = vunpack.c.l.b16 %v309
    %v342 = vunpack.c.l.b16 %v310
    %v343 = vunpack.c.l.b16 %v311
    %v344 = vunpack.c.l.b16 %v312
    %v345 = vunpack.c.l.b16 %v313
    %v346 = vpack.c.b16 %v331, %v330
    %v347 = vpack.c.b16 %v333, %v332
    %v348 = vpack.c.b16 %v335, %v334
    %v349 = vpack.c.b16 %v337, %v336
    %v350 = vpack.c.b16 %v339, %v338
    %v351 = vpack.c.b16 %v341, %v340
    %v352 = vpack.c.b16 %v343, %v342
    %v353 = vpack.c.b16 %v345, %v344
    %362 = vmatpush.bf16.msra.mxu0 %v353
    %363 = vmatpush.bf16.msra.mxu0 %v352
    %364 = vmatpush.bf16.msra.mxu0 %v351
    %365 = vmatpush.bf16.msra.mxu0 %v350
    %366 = vmatpush.bf16.msra.mxu0 %v349
    %367 = vmatpush.bf16.msra.mxu0 %v348
    %368 = vmatpush.bf16.msra.mxu0 %v347
    %369 = vmatpush.bf16.msra.mxu0 %v346
    %370 = vmatmul.bf16.gmra.mxu0 %v294
    %v371 = vpop.f32.mrf.mxu0
    %v372 = vadd.f32 0.0, %v371
    %v373 = vpop.f32.mrf.mxu0
    %v374 = vadd.f32 0.0, %v373
    %375 = vmatmul.bf16.gmra.mxu0 %v295
    %v376 = vpop.f32.mrf.mxu0
    %v377 = vadd.f32 0.0, %v376
    %v378 = vpop.f32.mrf.mxu0
    %v379 = vadd.f32 0.0, %v378
    %380 = vmatmul.bf16.gmra.mxu0 %v296
    %v381 = vpop.f32.mrf.mxu0
    %v382 = vadd.f32 0.0, %v381
    %v383 = vpop.f32.mrf.mxu0
    %v384 = vadd.f32 0.0, %v383
    %385 = vmatmul.bf16.gmra.mxu0 %v297
    %v386 = vpop.f32.mrf.mxu0
    %v387 = vadd.f32 0.0, %v386
    %v388 = vpop.f32.mrf.mxu0
    %v389 = vadd.f32 0.0, %v388
    %390 = vdwg.mxu0
    %v407 = vunpack.c.l.b16 %v180
    %v408 = vunpack.c.l.b16 %v181
    %v409 = vunpack.c.l.b16 %v182
    %v410 = vunpack.c.l.b16 %v183
    %v411 = vunpack.c.l.b16 %v184
    %v412 = vunpack.c.l.b16 %v185
    %v413 = vunpack.c.l.b16 %v186
    %v414 = vunpack.c.l.b16 %v187
    %v415 = vunpack.c.l.b16 %v188
    %v416 = vunpack.c.l.b16 %v189
    %v417 = vunpack.c.l.b16 %v190
    %v418 = vunpack.c.l.b16 %v191
    %v419 = vunpack.c.l.b16 %v192
    %v420 = vunpack.c.l.b16 %v193
    %v421 = vunpack.c.l.b16 %v194
    %v422 = vunpack.c.l.b16 %v195
    %v423 = vpack.c.b16 %v408, %v407
    %v424 = vpack.c.b16 %v410, %v409
    %v425 = vpack.c.b16 %v412, %v411
    %v426 = vpack.c.b16 %v414, %v413
    %v427 = vpack.c.b16 %v416, %v415
    %v428 = vpack.c.b16 %v418, %v417
    %v429 = vpack.c.b16 %v420, %v419
    %v430 = vpack.c.b16 %v422, %v421
    %439 = vmatpush.bf16.msra.mxu0 %v430
    %440 = vmatpush.bf16.msra.mxu0 %v429
    %441 = vmatpush.bf16.msra.mxu0 %v428
    %442 = vmatpush.bf16.msra.mxu0 %v427
    %443 = vmatpush.bf16.msra.mxu0 %v426
    %444 = vmatpush.bf16.msra.mxu0 %v425
    %445 = vmatpush.bf16.msra.mxu0 %v424
    %446 = vmatpush.bf16.msra.mxu0 %v423
    %447 = vmatmul.bf16.gmra.mxu0 %v176
    %v448 = vpop.f32.mrf.mxu0
    %v449 = vadd.f32 %v372, %v448
    %v450 = vpop.f32.mrf.mxu0
    %v451 = vadd.f32 %v374, %v450
    %452 = vmatmul.bf16.gmra.mxu0 %v177
    %v453 = vpop.f32.mrf.mxu0
    %v454 = vadd.f32 %v377, %v453
    %v455 = vpop.f32.mrf.mxu0
    %v456 = vadd.f32 %v379, %v455
    %457 = vmatmul.bf16.gmra.mxu0 %v178
    %v458 = vpop.f32.mrf.mxu0
    %v459 = vadd.f32 %v382, %v458
    %v460 = vpop.f32.mrf.mxu0
    %v461 = vadd.f32 %v384, %v460
    %462 = vmatmul.bf16.gmra.mxu0 %v179
    %v463 = vpop.f32.mrf.mxu0
    %v464 = vadd.f32 %v387, %v463
    %v465 = vpop.f32.mrf.mxu0
    %v466 = vadd.f32 %v389, %v465
    %467 = vdwg.mxu0
    %v468 = vpack.c.bf16 %v287, %v286
    %v469 = vpack.c.bf16 %v289, %v288
    %v470 = vpack.c.bf16 %v291, %v290
    %v471 = vpack.c.bf16 %v293, %v292
    %v472 = vld [vmem:[#allocation5 + $0x80] sm:$0xf]
    %v473 = vld [vmem:[#allocation5 + $0x84] sm:$0xf]
    %v474 = vld [vmem:[#allocation5 + $0x88] sm:$0xf]
    %v475 = vld [vmem:[#allocation5 + $0x8c] sm:$0xf]
    %v476 = vld [vmem:[#allocation5 + $0x90] sm:$0xf]
    %v477 = vld [vmem:[#allocation5 + $0x94] sm:$0xf]
    %v478 = vld [vmem:[#allocation5 + $0x98] sm:$0xf]
    %v479 = vld [vmem:[#allocation5 + $0x9c] sm:$0xf]
    %v480 = vld [vmem:[#allocation5 + $0xa0] sm:$0xf]
    %v481 = vld [vmem:[#allocation5 + $0xa4] sm:$0xf]
    %v482 = vld [vmem:[#allocation5 + $0xa8] sm:$0xf]
    %v483 = vld [vmem:[#allocation5 + $0xac] sm:$0xf]
    %v484 = vld [vmem:[#allocation5 + $0xb0] sm:$0xf]
    %v485 = vld [vmem:[#allocation5 + $0xb4] sm:$0xf]
    %v486 = vld [vmem:[#allocation5 + $0xb8] sm:$0xf]
    %v487 = vld [vmem:[#allocation5 + $0xbc] sm:$0xf]
    %v504 = vunpack.c.l.b16 %v472
    %v505 = vunpack.c.l.b16 %v473
    %v506 = vunpack.c.l.b16 %v474
    %v507 = vunpack.c.l.b16 %v475
    %v508 = vunpack.c.l.b16 %v476
    %v509 = vunpack.c.l.b16 %v477
    %v510 = vunpack.c.l.b16 %v478
    %v511 = vunpack.c.l.b16 %v479
    %v512 = vunpack.c.l.b16 %v480
    %v513 = vunpack.c.l.b16 %v481
    %v514 = vunpack.c.l.b16 %v482
    %v515 = vunpack.c.l.b16 %v483
    %v516 = vunpack.c.l.b16 %v484
    %v517 = vunpack.c.l.b16 %v485
    %v518 = vunpack.c.l.b16 %v486
    %v519 = vunpack.c.l.b16 %v487
    %v520 = vpack.c.b16 %v505, %v504
    %v521 = vpack.c.b16 %v507, %v506
    %v522 = vpack.c.b16 %v509, %v508
    %v523 = vpack.c.b16 %v511, %v510
    %v524 = vpack.c.b16 %v513, %v512
    %v525 = vpack.c.b16 %v515, %v514
    %v526 = vpack.c.b16 %v517, %v516
    %v527 = vpack.c.b16 %v519, %v518
    %536 = vmatpush.bf16.msra.mxu0 %v527
    %537 = vmatpush.bf16.msra.mxu0 %v526
    %538 = vmatpush.bf16.msra.mxu0 %v525
    %539 = vmatpush.bf16.msra.mxu0 %v524
    %540 = vmatpush.bf16.msra.mxu0 %v523
    %541 = vmatpush.bf16.msra.mxu0 %v522
    %542 = vmatpush.bf16.msra.mxu0 %v521
    %543 = vmatpush.bf16.msra.mxu0 %v520
    %544 = vmatmul.bf16.gmra.mxu0 %v468
    %v545 = vpop.f32.mrf.mxu0
    %v546 = vadd.f32 0.0, %v545
    %v547 = vpop.f32.mrf.mxu0
    %v548 = vadd.f32 0.0, %v547
    %549 = vmatmul.bf16.gmra.mxu0 %v469
    %v550 = vpop.f32.mrf.mxu0
    %v551 = vadd.f32 0.0, %v550
    %v552 = vpop.f32.mrf.mxu0
    %v553 = vadd.f32 0.0, %v552
    %554 = vmatmul.bf16.gmra.mxu0 %v470
    %v555 = vpop.f32.mrf.mxu0
    %v556 = vadd.f32 0.0, %v555
    %v557 = vpop.f32.mrf.mxu0
    %v558 = vadd.f32 0.0, %v557
    %559 = vmatmul.bf16.gmra.mxu0 %v471
    %v560 = vpop.f32.mrf.mxu0
    %v561 = vadd.f32 0.0, %v560
    %v562 = vpop.f32.mrf.mxu0
    %v563 = vadd.f32 0.0, %v562
    %564 = vdwg.mxu0
    %v565 = vadd.f32 %v449, %v546
    %v566 = vadd.f32 %v451, %v548
    %v567 = vadd.f32 %v454, %v551
    %v568 = vadd.f32 %v456, %v553
    %v569 = vadd.f32 %v459, %v556
    %v570 = vadd.f32 %v461, %v558
    %v571 = vadd.f32 %v464, %v561
    %v572 = vadd.f32 %v466, %v563
    %v573 = vperm.slane %v175, 0
    %v574 = vadd.f32 %v565, %v573
    %v575 = vadd.f32 %v566, %v573
    %v576 = vadd.f32 %v567, %v573
    %v577 = vadd.f32 %v568, %v573
    %v578 = vadd.f32 %v569, %v573
    %v579 = vadd.f32 %v570, %v573
    %v580 = vadd.f32 %v571, %v573
    %v581 = vadd.f32 %v572, %v573
    %v582 = vmax.f32 %v574, 0.0
    %v583 = vmax.f32 %v575, 0.0
    %v584 = vmax.f32 %v576, 0.0
    %v585 = vmax.f32 %v577, 0.0
    %v586 = vmax.f32 %v578, 0.0
    %v587 = vmax.f32 %v579, 0.0
    %v588 = vmax.f32 %v580, 0.0
    %v589 = vmax.f32 %v581, 0.0
    %v590 = vadd.f32 %v582, %v583
    %v591 = vadd.f32 %v590, %v584
    %v592 = vadd.f32 %v591, %v585
    %v593 = vadd.f32 %v592, %v586
    %v594 = vadd.f32 %v593, %v587
    %v595 = vadd.f32 %v594, %v588
    %v596 = vadd.f32 %v595, %v589
    %v597 = vrot.slane %v596, 4
    %v598 = vadd.f32 %v596, %v597
    %v599 = vrot.slane %v598, 2
    %v600 = vadd.f32 %v598, %v599
    %v601 = vrot.slane %v600, 1
    %v602 = vadd.f32 %v600, %v601
    %v603 = vrcp.pop 64.0
    %v604 = vmul.f32 64.0, %v603
    %v605 = vsub.f32 1.0, %v604
    %v606 = vmul.f32 %v603, %v605
    %v607 = vadd.f32 %v603, %v606
    %vm608 = vweird.f32 %v603
    %v609 = vsel %vm608, %v603, %v607
    %v610 = vmul.f32 %v602, %v609
    %v611 = vsub.f32 %v582, %v610
    %v612 = vsub.f32 %v583, %v610
    %v613 = vsub.f32 %v584, %v610
    %v614 = vsub.f32 %v585, %v610
    %v615 = vsub.f32 %v586, %v610
    %v616 = vsub.f32 %v587, %v610
    %v617 = vsub.f32 %v588, %v610
    %v618 = vsub.f32 %v589, %v610
    %v619 = vmul.f32 %v611, %v611
    %v620 = vmul.f32 %v612, %v612
    %v621 = vmul.f32 %v613, %v613
    %v622 = vmul.f32 %v614, %v614
    %v623 = vmul.f32 %v615, %v615
    %v624 = vmul.f32 %v616, %v616
    %v625 = vmul.f32 %v617, %v617
    %v626 = vmul.f32 %v618, %v618
    %v627 = vadd.f32 %v619, %v620
    %v628 = vadd.f32 %v627, %v621
    %v629 = vadd.f32 %v628, %v622
    %v630 = vadd.f32 %v629, %v623
    %v631 = vadd.f32 %v630, %v624
    %v632 = vadd.f32 %v631, %v625
    %v633 = vadd.f32 %v632, %v626
    %v634 = vrot.slane %v633, 4
    %v635 = vadd.f32 %v633, %v634
    %v636 = vrot.slane %v635, 2
    %v637 = vadd.f32 %v635, %v636
    %v638 = vrot.slane %v637, 1
    %v639 = vadd.f32 %v637, %v638
    %v640 = vmul.f32 %v639, %v609
    %v641 = vadd.f32 %v640, 1e-05
    %v642 = vrsqrt.pop %v641
    %v643 = vmul.f32 %v642, %v641
    %v644 = vmul.f32 %v643, %v642
    %v645 = vmul.f32 0.5, %v644
    %v646 = vsub.f32 1.5, %v645
    %v647 = vmul.f32 %v642, %v646
    %vm648 = vweird.f32 %v641
    %vm649 = vweird.f32 %v642
    %vm650 = vmor %vm648, %vm649
    %v651 = vsel %vm650, %v642, %v647
    %v652 = vmul.f32 %v175, %v651
    %v653 = vmul.f32 %v610, %v652
    %v655 = vrot.slane %v653, 7
    %v657 = vsub.f32 %v175, %v655
    %v658 = vperm.slane %v652, 1
    %v659 = vmul.f32 %v582, %v658
    %v660 = vmul.f32 %v583, %v658
    %v661 = vmul.f32 %v584, %v658
    %v662 = vmul.f32 %v585, %v658
    %v663 = vmul.f32 %v586, %v658
    %v664 = vmul.f32 %v587, %v658
    %v665 = vmul.f32 %v588, %v658
    %v666 = vmul.f32 %v589, %v658
    %v667 = vperm.slane %v657, 2
    %v668 = vadd.f32 %v659, %v667
    %v669 = vadd.f32 %v660, %v667
    %v670 = vadd.f32 %v661, %v667
    %v671 = vadd.f32 %v662, %v667
    %v672 = vadd.f32 %v663, %v667
    %v673 = vadd.f32 %v664, %v667
    %v674 = vadd.f32 %v665, %v667
    %v675 = vadd.f32 %v666, %v667
    %s676 = scalar_lea.vmem [#allocation7], 8
    %v677 = vld [vmem:[%s676] sm:$0xff]
    %v678 = vpack.c.bf16 %v669, %v668
    %v679 = vpack.c.bf16 %v671, %v670
    %v680 = vpack.c.bf16 %v673, %v672
    %v681 = vpack.c.bf16 %v675, %v674
    %v682 = vld [vmem:[#allocation5 + $0x100] sm:$0xf]
    %v683 = vld [vmem:[#allocation5 + $0x104] sm:$0xf]
    %v684 = vld [vmem:[#allocation5 + $0x108] sm:$0xf]
    %v685 = vld [vmem:[#allocation5 + $0x10c] sm:$0xf]
    %v686 = vld [vmem:[#allocation5 + $0x110] sm:$0xf]
    %v687 = vld [vmem:[#allocation5 + $0x114] sm:$0xf]
    %v688 = vld [vmem:[#allocation5 + $0x118] sm:$0xf]
    %v689 = vld [vmem:[#allocation5 + $0x11c] sm:$0xf]
    %v690 = vld [vmem:[#allocation5 + $0x120] sm:$0xf]
    %v691 = vld [vmem:[#allocation5 + $0x124] sm:$0xf]
    %v692 = vld [vmem:[#allocation5 + $0x128] sm:$0xf]
    %v693 = vld [vmem:[#allocation5 + $0x12c] sm:$0xf]
    %v694 = vld [vmem:[#allocation5 + $0x130] sm:$0xf]
    %v695 = vld [vmem:[#allocation5 + $0x134] sm:$0xf]
    %v696 = vld [vmem:[#allocation5 + $0x138] sm:$0xf]
    %v697 = vld [vmem:[#allocation5 + $0x13c] sm:$0xf]
    %vm698 = vcmp.ge.s32.totalorder %v167, 2
    %vm699 = vcmp.ge.s32.totalorder %v168, 2
    %vm700 = vcmp.ge.s32.totalorder %v169, 2
    %vm701 = vcmp.ge.s32.totalorder %v170, 2
    %vm702 = vcmp.ge.s32.totalorder %v171, 2
    %vm703 = vcmp.ge.s32.totalorder %v172, 2
    %vm704 = vcmp.ge.s32.totalorder %v173, 2
    %vm705 = vcmp.ge.s32.totalorder %v174, 2
    %v706 = vrot.slane %v668, 6
    %v707 = vrot.slane %v669, 6
    %v708 = vrot.slane %v670, 6
    %v709 = vrot.slane %v671, 6
    %v710 = vrot.slane %v672, 6
    %v711 = vrot.slane %v673, 6
    %v712 = vrot.slane %v674, 6
    %v713 = vrot.slane %v675, 6
    %vm714 = vcmp.lt.s32.totalorder %v71, 2
    %v715 = vsel %vm714, %v712, %v713
    %v716 = vsel %vm714, %v711, %v712
    %v717 = vsel %vm714, %v710, %v711
    %v718 = vsel %vm714, %v709, %v710
    %v719 = vsel %vm714, %v708, %v709
    %v720 = vsel %vm714, %v707, %v708
    %v721 = vsel %vm714, %v706, %v707
    %v722 = vsel %vm714, %v713, %v706
    %v723 = vsel %vm698, 1, 0
    %v724 = vsel %vm699, 1, 0
    %v725 = vsel %vm700, 1, 0
    %v726 = vsel %vm701, 1, 0
    %v727 = vsel %vm702, 1, 0
    %v728 = vsel %vm703, 1, 0
    %v729 = vsel %vm704, 1, 0
    %v730 = vsel %vm705, 1, 0
    %vm731 = vcmp.eq.s32.totalorder %v723, 1
    %vm732 = vcmp.eq.s32.totalorder %v724, 1
    %vm733 = vcmp.eq.s32.totalorder %v725, 1
    %vm734 = vcmp.eq.s32.totalorder %v726, 1
    %vm735 = vcmp.eq.s32.totalorder %v727, 1
    %vm736 = vcmp.eq.s32.totalorder %v728, 1
    %vm737 = vcmp.eq.s32.totalorder %v729, 1
    %vm738 = vcmp.eq.s32.totalorder %v730, 1
    %v739 = vsel %vm731, %v722, 0.0
    %v740 = vsel %vm732, %v721, 0.0
    %v741 = vsel %vm733, %v720, 0.0
    %v742 = vsel %vm734, %v719, 0.0
    %v743 = vsel %vm735, %v718, 0.0
    %v744 = vsel %vm736, %v717, 0.0
    %v745 = vsel %vm737, %v716, 0.0
    %v746 = vsel %vm738, %v715, 0.0
    %vm747 = vcmp.lt.s32.totalorder %v167, 30
    %vm748 = vcmp.lt.s32.totalorder %v168, 30
    %vm749 = vcmp.lt.s32.totalorder %v169, 30
    %vm750 = vcmp.lt.s32.totalorder %v170, 30
    %vm751 = vcmp.lt.s32.totalorder %v171, 30
    %vm752 = vcmp.lt.s32.totalorder %v172, 30
    %vm753 = vcmp.lt.s32.totalorder %v173, 30
    %vm754 = vcmp.lt.s32.totalorder %v174, 30
    %v755 = vrot.slane %v668, 2
    %v756 = vrot.slane %v669, 2
    %v757 = vrot.slane %v670, 2
    %v758 = vrot.slane %v671, 2
    %v759 = vrot.slane %v672, 2
    %v760 = vrot.slane %v673, 2
    %v761 = vrot.slane %v674, 2
    %v762 = vrot.slane %v675, 2
    %vm763 = vcmp.lt.s32.totalorder %v71, 6
    %v764 = vsel %vm763, %v761, %v762
    %v765 = vsel %vm763, %v760, %v761
    %v766 = vsel %vm763, %v759, %v760
    %v767 = vsel %vm763, %v758, %v759
    %v768 = vsel %vm763, %v757, %v758
    %v769 = vsel %vm763, %v756, %v757
    %v770 = vsel %vm763, %v755, %v756
    %v771 = vsel %vm763, %v762, %v755
    %v772 = vsel %vm747, 1, 0
    %v773 = vsel %vm748, 1, 0
    %v774 = vsel %vm749, 1, 0
    %v775 = vsel %vm750, 1, 0
    %v776 = vsel %vm751, 1, 0
    %v777 = vsel %vm752, 1, 0
    %v778 = vsel %vm753, 1, 0
    %v779 = vsel %vm754, 1, 0
    %vm780 = vcmp.eq.s32.totalorder %v772, 1
    %vm781 = vcmp.eq.s32.totalorder %v773, 1
    %vm782 = vcmp.eq.s32.totalorder %v774, 1
    %vm783 = vcmp.eq.s32.totalorder %v775, 1
    %vm784 = vcmp.eq.s32.totalorder %v776, 1
    %vm785 = vcmp.eq.s32.totalorder %v777, 1
    %vm786 = vcmp.eq.s32.totalorder %v778, 1
    %vm787 = vcmp.eq.s32.totalorder %v779, 1
    %v788 = vsel %vm780, %v770, 0.0
    %v789 = vsel %vm781, %v769, 0.0
    %v790 = vsel %vm782, %v768, 0.0
    %v791 = vsel %vm783, %v767, 0.0
    %v792 = vsel %vm784, %v766, 0.0
    %v793 = vsel %vm785, %v765, 0.0
    %v794 = vsel %vm786, %v764, 0.0
    %v795 = vsel %vm787, %v771, 0.0
    %v796 = vpack.c.bf16 %v740, %v739
    %v797 = vpack.c.bf16 %v742, %v741
    %v798 = vpack.c.bf16 %v744, %v743
    %v799 = vpack.c.bf16 %v746, %v745
    %v800 = vld [vmem:[#allocation5 + $0xc0] sm:$0xf]
    %v801 = vld [vmem:[#allocation5 + $0xc4] sm:$0xf]
    %v802 = vld [vmem:[#allocation5 + $0xc8] sm:$0xf]
    %v803 = vld [vmem:[#allocation5 + $0xcc] sm:$0xf]
    %v804 = vld [vmem:[#allocation5 + $0xd0] sm:$0xf]
    %v805 = vld [vmem:[#allocation5 + $0xd4] sm:$0xf]
    %v806 = vld [vmem:[#allocation5 + $0xd8] sm:$0xf]
    %v807 = vld [vmem:[#allocation5 + $0xdc] sm:$0xf]
    %v808 = vld [vmem:[#allocation5 + $0xe0] sm:$0xf]
    %v809 = vld [vmem:[#allocation5 + $0xe4] sm:$0xf]
    %v810 = vld [vmem:[#allocation5 + $0xe8] sm:$0xf]
    %v811 = vld [vmem:[#allocation5 + $0xec] sm:$0xf]
    %v812 = vld [vmem:[#allocation5 + $0xf0] sm:$0xf]
    %v813 = vld [vmem:[#allocation5 + $0xf4] sm:$0xf]
    %v814 = vld [vmem:[#allocation5 + $0xf8] sm:$0xf]
    %v815 = vld [vmem:[#allocation5 + $0xfc] sm:$0xf]
    %v832 = vunpack.c.l.b16 %v800
    %v833 = vunpack.c.l.b16 %v801
    %v834 = vunpack.c.l.b16 %v802
    %v835 = vunpack.c.l.b16 %v803
    %v836 = vunpack.c.l.b16 %v804
    %v837 = vunpack.c.l.b16 %v805
    %v838 = vunpack.c.l.b16 %v806
    %v839 = vunpack.c.l.b16 %v807
    %v840 = vunpack.c.l.b16 %v808
    %v841 = vunpack.c.l.b16 %v809
    %v842 = vunpack.c.l.b16 %v810
    %v843 = vunpack.c.l.b16 %v811
    %v844 = vunpack.c.l.b16 %v812
    %v845 = vunpack.c.l.b16 %v813
    %v846 = vunpack.c.l.b16 %v814
    %v847 = vunpack.c.l.b16 %v815
    %v848 = vpack.c.b16 %v833, %v832
    %v849 = vpack.c.b16 %v835, %v834
    %v850 = vpack.c.b16 %v837, %v836
    %v851 = vpack.c.b16 %v839, %v838
    %v852 = vpack.c.b16 %v841, %v840
    %v853 = vpack.c.b16 %v843, %v842
    %v854 = vpack.c.b16 %v845, %v844
    %v855 = vpack.c.b16 %v847, %v846
    %864 = vmatpush.bf16.msra.mxu0 %v855
    %865 = vmatpush.bf16.msra.mxu0 %v854
    %866 = vmatpush.bf16.msra.mxu0 %v853
    %867 = vmatpush.bf16.msra.mxu0 %v852
    %868 = vmatpush.bf16.msra.mxu0 %v851
    %869 = vmatpush.bf16.msra.mxu0 %v850
    %870 = vmatpush.bf16.msra.mxu0 %v849
    %871 = vmatpush.bf16.msra.mxu0 %v848
    %872 = vmatmul.bf16.gmra.mxu0 %v796
    %v873 = vpop.f32.mrf.mxu0
    %v874 = vadd.f32 0.0, %v873
    %v875 = vpop.f32.mrf.mxu0
    %v876 = vadd.f32 0.0, %v875
    %877 = vmatmul.bf16.gmra.mxu0 %v797
    %v878 = vpop.f32.mrf.mxu0
    %v879 = vadd.f32 0.0, %v878
    %v880 = vpop.f32.mrf.mxu0
    %v881 = vadd.f32 0.0, %v880
    %882 = vmatmul.bf16.gmra.mxu0 %v798
    %v883 = vpop.f32.mrf.mxu0
    %v884 = vadd.f32 0.0, %v883
    %v885 = vpop.f32.mrf.mxu0
    %v886 = vadd.f32 0.0, %v885
    %887 = vmatmul.bf16.gmra.mxu0 %v799
    %v888 = vpop.f32.mrf.mxu0
    %v889 = vadd.f32 0.0, %v888
    %v890 = vpop.f32.mrf.mxu0
    %v891 = vadd.f32 0.0, %v890
    %892 = vdwg.mxu0
    %v909 = vunpack.c.l.b16 %v682
    %v910 = vunpack.c.l.b16 %v683
    %v911 = vunpack.c.l.b16 %v684
    %v912 = vunpack.c.l.b16 %v685
    %v913 = vunpack.c.l.b16 %v686
    %v914 = vunpack.c.l.b16 %v687
    %v915 = vunpack.c.l.b16 %v688
    %v916 = vunpack.c.l.b16 %v689
    %v917 = vunpack.c.l.b16 %v690
    %v918 = vunpack.c.l.b16 %v691
    %v919 = vunpack.c.l.b16 %v692
    %v920 = vunpack.c.l.b16 %v693
    %v921 = vunpack.c.l.b16 %v694
    %v922 = vunpack.c.l.b16 %v695
    %v923 = vunpack.c.l.b16 %v696
    %v924 = vunpack.c.l.b16 %v697
    %v925 = vpack.c.b16 %v910, %v909
    %v926 = vpack.c.b16 %v912, %v911
    %v927 = vpack.c.b16 %v914, %v913
    %v928 = vpack.c.b16 %v916, %v915
    %v929 = vpack.c.b16 %v918, %v917
    %v930 = vpack.c.b16 %v920, %v919
    %v931 = vpack.c.b16 %v922, %v921
    %v932 = vpack.c.b16 %v924, %v923
    %941 = vmatpush.bf16.msra.mxu0 %v932
    %942 = vmatpush.bf16.msra.mxu0 %v931
    %943 = vmatpush.bf16.msra.mxu0 %v930
    %944 = vmatpush.bf16.msra.mxu0 %v929
    %945 = vmatpush.bf16.msra.mxu0 %v928
    %946 = vmatpush.bf16.msra.mxu0 %v927
    %947 = vmatpush.bf16.msra.mxu0 %v926
    %948 = vmatpush.bf16.msra.mxu0 %v925
    %949 = vmatmul.bf16.gmra.mxu0 %v678
    %v950 = vpop.f32.mrf.mxu0
    %v951 = vadd.f32 %v874, %v950
    %v952 = vpop.f32.mrf.mxu0
    %v953 = vadd.f32 %v876, %v952
    %954 = vmatmul.bf16.gmra.mxu0 %v679
    %v955 = vpop.f32.mrf.mxu0
    %v956 = vadd.f32 %v879, %v955
    %v957 = vpop.f32.mrf.mxu0
    %v958 = vadd.f32 %v881, %v957
    %959 = vmatmul.bf16.gmra.mxu0 %v680
    %v960 = vpop.f32.mrf.mxu0
    %v961 = vadd.f32 %v884, %v960
    %v962 = vpop.f32.mrf.mxu0
    %v963 = vadd.f32 %v886, %v962
    %964 = vmatmul.bf16.gmra.mxu0 %v681
    %v965 = vpop.f32.mrf.mxu0
    %v966 = vadd.f32 %v889, %v965
    %v967 = vpop.f32.mrf.mxu0
    %v968 = vadd.f32 %v891, %v967
    %969 = vdwg.mxu0
    %v970 = vpack.c.bf16 %v789, %v788
    %v971 = vpack.c.bf16 %v791, %v790
    %v972 = vpack.c.bf16 %v793, %v792
    %v973 = vpack.c.bf16 %v795, %v794
    %v974 = vld [vmem:[#allocation5 + $0x140] sm:$0xf]
    %v975 = vld [vmem:[#allocation5 + $0x144] sm:$0xf]
    %v976 = vld [vmem:[#allocation5 + $0x148] sm:$0xf]
    %v977 = vld [vmem:[#allocation5 + $0x14c] sm:$0xf]
    %v978 = vld [vmem:[#allocation5 + $0x150] sm:$0xf]
    %v979 = vld [vmem:[#allocation5 + $0x154] sm:$0xf]
    %v980 = vld [vmem:[#allocation5 + $0x158] sm:$0xf]
    %v981 = vld [vmem:[#allocation5 + $0x15c] sm:$0xf]
    %v982 = vld [vmem:[#allocation5 + $0x160] sm:$0xf]
    %v983 = vld [vmem:[#allocation5 + $0x164] sm:$0xf]
    %v984 = vld [vmem:[#allocation5 + $0x168] sm:$0xf]
    %v985 = vld [vmem:[#allocation5 + $0x16c] sm:$0xf]
    %v986 = vld [vmem:[#allocation5 + $0x170] sm:$0xf]
    %v987 = vld [vmem:[#allocation5 + $0x174] sm:$0xf]
    %v988 = vld [vmem:[#allocation5 + $0x178] sm:$0xf]
    %v989 = vld [vmem:[#allocation5 + $0x17c] sm:$0xf]
    %v1006 = vunpack.c.l.b16 %v974
    %v1007 = vunpack.c.l.b16 %v975
    %v1008 = vunpack.c.l.b16 %v976
    %v1009 = vunpack.c.l.b16 %v977
    %v1010 = vunpack.c.l.b16 %v978
    %v1011 = vunpack.c.l.b16 %v979
    %v1012 = vunpack.c.l.b16 %v980
    %v1013 = vunpack.c.l.b16 %v981
    %v1014 = vunpack.c.l.b16 %v982
    %v1015 = vunpack.c.l.b16 %v983
    %v1016 = vunpack.c.l.b16 %v984
    %v1017 = vunpack.c.l.b16 %v985
    %v1018 = vunpack.c.l.b16 %v986
    %v1019 = vunpack.c.l.b16 %v987
    %v1020 = vunpack.c.l.b16 %v988
    %v1021 = vunpack.c.l.b16 %v989
    %v1022 = vpack.c.b16 %v1007, %v1006
    %v1023 = vpack.c.b16 %v1009, %v1008
    %v1024 = vpack.c.b16 %v1011, %v1010
    %v1025 = vpack.c.b16 %v1013, %v1012
    %v1026 = vpack.c.b16 %v1015, %v1014
    %v1027 = vpack.c.b16 %v1017, %v1016
    %v1028 = vpack.c.b16 %v1019, %v1018
    %v1029 = vpack.c.b16 %v1021, %v1020
    %1038 = vmatpush.bf16.msra.mxu0 %v1029
    %1039 = vmatpush.bf16.msra.mxu0 %v1028
    %1040 = vmatpush.bf16.msra.mxu0 %v1027
    %1041 = vmatpush.bf16.msra.mxu0 %v1026
    %1042 = vmatpush.bf16.msra.mxu0 %v1025
    %1043 = vmatpush.bf16.msra.mxu0 %v1024
    %1044 = vmatpush.bf16.msra.mxu0 %v1023
    %1045 = vmatpush.bf16.msra.mxu0 %v1022
    %1046 = vmatmul.bf16.gmra.mxu0 %v970
    %v1047 = vpop.f32.mrf.mxu0
    %v1048 = vadd.f32 0.0, %v1047
    %v1049 = vpop.f32.mrf.mxu0
    %v1050 = vadd.f32 0.0, %v1049
    %1051 = vmatmul.bf16.gmra.mxu0 %v971
    %v1052 = vpop.f32.mrf.mxu0
    %v1053 = vadd.f32 0.0, %v1052
    %v1054 = vpop.f32.mrf.mxu0
    %v1055 = vadd.f32 0.0, %v1054
    %1056 = vmatmul.bf16.gmra.mxu0 %v972
    %v1057 = vpop.f32.mrf.mxu0
    %v1058 = vadd.f32 0.0, %v1057
    %v1059 = vpop.f32.mrf.mxu0
    %v1060 = vadd.f32 0.0, %v1059
    %1061 = vmatmul.bf16.gmra.mxu0 %v973
    %v1062 = vpop.f32.mrf.mxu0
    %v1063 = vadd.f32 0.0, %v1062
    %v1064 = vpop.f32.mrf.mxu0
    %v1065 = vadd.f32 0.0, %v1064
    %1066 = vdwg.mxu0
    %v1067 = vadd.f32 %v951, %v1048
    %v1068 = vadd.f32 %v953, %v1050
    %v1069 = vadd.f32 %v956, %v1053
    %v1070 = vadd.f32 %v958, %v1055
    %v1071 = vadd.f32 %v961, %v1058
    %v1072 = vadd.f32 %v963, %v1060
    %v1073 = vadd.f32 %v966, %v1063
    %v1074 = vadd.f32 %v968, %v1065
    %v1075 = vperm.slane %v677, 0
    %v1076 = vadd.f32 %v1067, %v1075
    %v1077 = vadd.f32 %v1068, %v1075
    %v1078 = vadd.f32 %v1069, %v1075
    %v1079 = vadd.f32 %v1070, %v1075
    %v1080 = vadd.f32 %v1071, %v1075
    %v1081 = vadd.f32 %v1072, %v1075
    %v1082 = vadd.f32 %v1073, %v1075
    %v1083 = vadd.f32 %v1074, %v1075
    %v1084 = vmax.f32 %v1076, 0.0
    %v1085 = vmax.f32 %v1077, 0.0
    %v1086 = vmax.f32 %v1078, 0.0
    %v1087 = vmax.f32 %v1079, 0.0
    %v1088 = vmax.f32 %v1080, 0.0
    %v1089 = vmax.f32 %v1081, 0.0
    %v1090 = vmax.f32 %v1082, 0.0
    %v1091 = vmax.f32 %v1083, 0.0
    %v1092 = vadd.f32 %v1084, %v1085
    %v1093 = vadd.f32 %v1092, %v1086
    %v1094 = vadd.f32 %v1093, %v1087
    %v1095 = vadd.f32 %v1094, %v1088
    %v1096 = vadd.f32 %v1095, %v1089
    %v1097 = vadd.f32 %v1096, %v1090
    %v1098 = vadd.f32 %v1097, %v1091
    %v1099 = vrot.slane %v1098, 4
    %v1100 = vadd.f32 %v1098, %v1099
    %v1101 = vrot.slane %v1100, 2
    %v1102 = vadd.f32 %v1100, %v1101
    %v1103 = vrot.slane %v1102, 1
    %v1104 = vadd.f32 %v1102, %v1103
    %v1105 = vmul.f32 %v1104, %v609
    %v1106 = vsub.f32 %v1084, %v1105
    %v1107 = vsub.f32 %v1085, %v1105
    %v1108 = vsub.f32 %v1086, %v1105
    %v1109 = vsub.f32 %v1087, %v1105
    %v1110 = vsub.f32 %v1088, %v1105
    %v1111 = vsub.f32 %v1089, %v1105
    %v1112 = vsub.f32 %v1090, %v1105
    %v1113 = vsub.f32 %v1091, %v1105
    %v1114 = vmul.f32 %v1106, %v1106
    %v1115 = vmul.f32 %v1107, %v1107
    %v1116 = vmul.f32 %v1108, %v1108
    %v1117 = vmul.f32 %v1109, %v1109
    %v1118 = vmul.f32 %v1110, %v1110
    %v1119 = vmul.f32 %v1111, %v1111
    %v1120 = vmul.f32 %v1112, %v1112
    %v1121 = vmul.f32 %v1113, %v1113
    %v1122 = vadd.f32 %v1114, %v1115
    %v1123 = vadd.f32 %v1122, %v1116
    %v1124 = vadd.f32 %v1123, %v1117
    %v1125 = vadd.f32 %v1124, %v1118
    %v1126 = vadd.f32 %v1125, %v1119
    %v1127 = vadd.f32 %v1126, %v1120
    %v1128 = vadd.f32 %v1127, %v1121
    %v1129 = vrot.slane %v1128, 4
    %v1130 = vadd.f32 %v1128, %v1129
    %v1131 = vrot.slane %v1130, 2
    %v1132 = vadd.f32 %v1130, %v1131
    %v1133 = vrot.slane %v1132, 1
    %v1134 = vadd.f32 %v1132, %v1133
    %v1135 = vmul.f32 %v1134, %v609
    %v1136 = vadd.f32 %v1135, 1e-05
    %v1137 = vrsqrt.pop %v1136
    %v1138 = vmul.f32 %v1137, %v1136
    %v1139 = vmul.f32 %v1138, %v1137
    %v1140 = vmul.f32 0.5, %v1139
    %v1141 = vsub.f32 1.5, %v1140
    %v1142 = vmul.f32 %v1137, %v1141
    %vm1143 = vweird.f32 %v1136
    %vm1144 = vweird.f32 %v1137
    %vm1145 = vmor %vm1143, %vm1144
    %v1146 = vsel %vm1145, %v1137, %v1142
    %v1147 = vmul.f32 %v677, %v1146
    %v1148 = vmul.f32 %v1105, %v1147
    %v1150 = vrot.slane %v1148, 7
    %v1152 = vsub.f32 %v677, %v1150
    %v1153 = vperm.slane %v1147, 1
    %v1154 = vmul.f32 %v1084, %v1153
    %v1155 = vmul.f32 %v1085, %v1153
    %v1156 = vmul.f32 %v1086, %v1153
    %v1157 = vmul.f32 %v1087, %v1153
    %v1158 = vmul.f32 %v1088, %v1153
    %v1159 = vmul.f32 %v1089, %v1153
    %v1160 = vmul.f32 %v1090, %v1153
    %v1161 = vmul.f32 %v1091, %v1153
    %v1162 = vperm.slane %v1152, 2
    %v1163 = vadd.f32 %v1154, %v1162
    %v1164 = vadd.f32 %v1155, %v1162
    %v1165 = vadd.f32 %v1156, %v1162
    %v1166 = vadd.f32 %v1157, %v1162
    %v1167 = vadd.f32 %v1158, %v1162
    %v1168 = vadd.f32 %v1159, %v1162
    %v1169 = vadd.f32 %v1160, %v1162
    %v1170 = vadd.f32 %v1161, %v1162
    %s1171 = scalar_lea.vmem [#allocation7], 16
    %v1172 = vld [vmem:[%s1171] sm:$0xff]
    %v1173 = vpack.c.bf16 %v1164, %v1163
    %v1174 = vpack.c.bf16 %v1166, %v1165
    %v1175 = vpack.c.bf16 %v1168, %v1167
    %v1176 = vpack.c.bf16 %v1170, %v1169
    %v1177 = vld [vmem:[#allocation5 + $0x1c0] sm:$0xf]
    %v1178 = vld [vmem:[#allocation5 + $0x1c4] sm:$0xf]
    %v1179 = vld [vmem:[#allocation5 + $0x1c8] sm:$0xf]
    %v1180 = vld [vmem:[#allocation5 + $0x1cc] sm:$0xf]
    %v1181 = vld [vmem:[#allocation5 + $0x1d0] sm:$0xf]
    %v1182 = vld [vmem:[#allocation5 + $0x1d4] sm:$0xf]
    %v1183 = vld [vmem:[#allocation5 + $0x1d8] sm:$0xf]
    %v1184 = vld [vmem:[#allocation5 + $0x1dc] sm:$0xf]
    %v1185 = vld [vmem:[#allocation5 + $0x1e0] sm:$0xf]
    %v1186 = vld [vmem:[#allocation5 + $0x1e4] sm:$0xf]
    %v1187 = vld [vmem:[#allocation5 + $0x1e8] sm:$0xf]
    %v1188 = vld [vmem:[#allocation5 + $0x1ec] sm:$0xf]
    %v1189 = vld [vmem:[#allocation5 + $0x1f0] sm:$0xf]
    %v1190 = vld [vmem:[#allocation5 + $0x1f4] sm:$0xf]
    %v1191 = vld [vmem:[#allocation5 + $0x1f8] sm:$0xf]
    %v1192 = vld [vmem:[#allocation5 + $0x1fc] sm:$0xf]
    %vm1193 = vcmp.ge.s32.totalorder %v167, 4
    %vm1194 = vcmp.ge.s32.totalorder %v168, 4
    %vm1195 = vcmp.ge.s32.totalorder %v169, 4
    %vm1196 = vcmp.ge.s32.totalorder %v170, 4
    %vm1197 = vcmp.ge.s32.totalorder %v171, 4
    %vm1198 = vcmp.ge.s32.totalorder %v172, 4
    %vm1199 = vcmp.ge.s32.totalorder %v173, 4
    %vm1200 = vcmp.ge.s32.totalorder %v174, 4
    %v1201 = vrot.slane %v1163, 4
    %v1202 = vrot.slane %v1164, 4
    %v1203 = vrot.slane %v1165, 4
    %v1204 = vrot.slane %v1166, 4
    %v1205 = vrot.slane %v1167, 4
    %v1206 = vrot.slane %v1168, 4
    %v1207 = vrot.slane %v1169, 4
    %v1208 = vrot.slane %v1170, 4
    %vm1209 = vcmp.lt.s32.totalorder %v71, 4
    %v1210 = vsel %vm1209, %v1207, %v1208
    %v1211 = vsel %vm1209, %v1206, %v1207
    %v1212 = vsel %vm1209, %v1205, %v1206
    %v1213 = vsel %vm1209, %v1204, %v1205
    %v1214 = vsel %vm1209, %v1203, %v1204
    %v1215 = vsel %vm1209, %v1202, %v1203
    %v1216 = vsel %vm1209, %v1201, %v1202
    %v1217 = vsel %vm1209, %v1208, %v1201
    %v1218 = vsel %vm1193, 1, 0
    %v1219 = vsel %vm1194, 1, 0
    %v1220 = vsel %vm1195, 1, 0
    %v1221 = vsel %vm1196, 1, 0
    %v1222 = vsel %vm1197, 1, 0
    %v1223 = vsel %vm1198, 1, 0
    %v1224 = vsel %vm1199, 1, 0
    %v1225 = vsel %vm1200, 1, 0
    %vm1226 = vcmp.eq.s32.totalorder %v1218, 1
    %vm1227 = vcmp.eq.s32.totalorder %v1219, 1
    %vm1228 = vcmp.eq.s32.totalorder %v1220, 1
    %vm1229 = vcmp.eq.s32.totalorder %v1221, 1
    %vm1230 = vcmp.eq.s32.totalorder %v1222, 1
    %vm1231 = vcmp.eq.s32.totalorder %v1223, 1
    %vm1232 = vcmp.eq.s32.totalorder %v1224, 1
    %vm1233 = vcmp.eq.s32.totalorder %v1225, 1
    %v1234 = vsel %vm1226, %v1217, 0.0
    %v1235 = vsel %vm1227, %v1216, 0.0
    %v1236 = vsel %vm1228, %v1215, 0.0
    %v1237 = vsel %vm1229, %v1214, 0.0
    %v1238 = vsel %vm1230, %v1213, 0.0
    %v1239 = vsel %vm1231, %v1212, 0.0
    %v1240 = vsel %vm1232, %v1211, 0.0
    %v1241 = vsel %vm1233, %v1210, 0.0
    %vm1242 = vcmp.lt.s32.totalorder %v167, 28
    %vm1243 = vcmp.lt.s32.totalorder %v168, 28
    %vm1244 = vcmp.lt.s32.totalorder %v169, 28
    %vm1245 = vcmp.lt.s32.totalorder %v170, 28
    %vm1246 = vcmp.lt.s32.totalorder %v171, 28
    %vm1247 = vcmp.lt.s32.totalorder %v172, 28
    %vm1248 = vcmp.lt.s32.totalorder %v173, 28
    %vm1249 = vcmp.lt.s32.totalorder %v174, 28
    %v1250 = vsel %vm1242, 1, 0
    %v1251 = vsel %vm1243, 1, 0
    %v1252 = vsel %vm1244, 1, 0
    %v1253 = vsel %vm1245, 1, 0
    %v1254 = vsel %vm1246, 1, 0
    %v1255 = vsel %vm1247, 1, 0
    %v1256 = vsel %vm1248, 1, 0
    %v1257 = vsel %vm1249, 1, 0
    %vm1258 = vcmp.eq.s32.totalorder %v1250, 1
    %vm1259 = vcmp.eq.s32.totalorder %v1251, 1
    %vm1260 = vcmp.eq.s32.totalorder %v1252, 1
    %vm1261 = vcmp.eq.s32.totalorder %v1253, 1
    %vm1262 = vcmp.eq.s32.totalorder %v1254, 1
    %vm1263 = vcmp.eq.s32.totalorder %v1255, 1
    %vm1264 = vcmp.eq.s32.totalorder %v1256, 1
    %vm1265 = vcmp.eq.s32.totalorder %v1257, 1
    %v1266 = vsel %vm1258, %v1216, 0.0
    %v1267 = vsel %vm1259, %v1215, 0.0
    %v1268 = vsel %vm1260, %v1214, 0.0
    %v1269 = vsel %vm1261, %v1213, 0.0
    %v1270 = vsel %vm1262, %v1212, 0.0
    %v1271 = vsel %vm1263, %v1211, 0.0
    %v1272 = vsel %vm1264, %v1210, 0.0
    %v1273 = vsel %vm1265, %v1217, 0.0
    %v1274 = vpack.c.bf16 %v1235, %v1234
    %v1275 = vpack.c.bf16 %v1237, %v1236
    %v1276 = vpack.c.bf16 %v1239, %v1238
    %v1277 = vpack.c.bf16 %v1241, %v1240
    %v1278 = vld [vmem:[#allocation5 + $0x180] sm:$0xf]
    %v1279 = vld [vmem:[#allocation5 + $0x184] sm:$0xf]
    %v1280 = vld [vmem:[#allocation5 + $0x188] sm:$0xf]
    %v1281 = vld [vmem:[#allocation5 + $0x18c] sm:$0xf]
    %v1282 = vld [vmem:[#allocation5 + $0x190] sm:$0xf]
    %v1283 = vld [vmem:[#allocation5 + $0x194] sm:$0xf]
    %v1284 = vld [vmem:[#allocation5 + $0x198] sm:$0xf]
    %v1285 = vld [vmem:[#allocation5 + $0x19c] sm:$0xf]
    %v1286 = vld [vmem:[#allocation5 + $0x1a0] sm:$0xf]
    %v1287 = vld [vmem:[#allocation5 + $0x1a4] sm:$0xf]
    %v1288 = vld [vmem:[#allocation5 + $0x1a8] sm:$0xf]
    %v1289 = vld [vmem:[#allocation5 + $0x1ac] sm:$0xf]
    %v1290 = vld [vmem:[#allocation5 + $0x1b0] sm:$0xf]
    %v1291 = vld [vmem:[#allocation5 + $0x1b4] sm:$0xf]
    %v1292 = vld [vmem:[#allocation5 + $0x1b8] sm:$0xf]
    %v1293 = vld [vmem:[#allocation5 + $0x1bc] sm:$0xf]
    %v1310 = vunpack.c.l.b16 %v1278
    %v1311 = vunpack.c.l.b16 %v1279
    %v1312 = vunpack.c.l.b16 %v1280
    %v1313 = vunpack.c.l.b16 %v1281
    %v1314 = vunpack.c.l.b16 %v1282
    %v1315 = vunpack.c.l.b16 %v1283
    %v1316 = vunpack.c.l.b16 %v1284
    %v1317 = vunpack.c.l.b16 %v1285
    %v1318 = vunpack.c.l.b16 %v1286
    %v1319 = vunpack.c.l.b16 %v1287
    %v1320 = vunpack.c.l.b16 %v1288
    %v1321 = vunpack.c.l.b16 %v1289
    %v1322 = vunpack.c.l.b16 %v1290
    %v1323 = vunpack.c.l.b16 %v1291
    %v1324 = vunpack.c.l.b16 %v1292
    %v1325 = vunpack.c.l.b16 %v1293
    %v1326 = vpack.c.b16 %v1311, %v1310
    %v1327 = vpack.c.b16 %v1313, %v1312
    %v1328 = vpack.c.b16 %v1315, %v1314
    %v1329 = vpack.c.b16 %v1317, %v1316
    %v1330 = vpack.c.b16 %v1319, %v1318
    %v1331 = vpack.c.b16 %v1321, %v1320
    %v1332 = vpack.c.b16 %v1323, %v1322
    %v1333 = vpack.c.b16 %v1325, %v1324
    %1342 = vmatpush.bf16.msra.mxu0 %v1333
    %1343 = vmatpush.bf16.msra.mxu0 %v1332
    %1344 = vmatpush.bf16.msra.mxu0 %v1331
    %1345 = vmatpush.bf16.msra.mxu0 %v1330
    %1346 = vmatpush.bf16.msra.mxu0 %v1329
    %1347 = vmatpush.bf16.msra.mxu0 %v1328
    %1348 = vmatpush.bf16.msra.mxu0 %v1327
    %1349 = vmatpush.bf16.msra.mxu0 %v1326
    %1350 = vmatmul.bf16.gmra.mxu0 %v1274
    %v1351 = vpop.f32.mrf.mxu0
    %v1352 = vadd.f32 0.0, %v1351
    %v1353 = vpop.f32.mrf.mxu0
    %v1354 = vadd.f32 0.0, %v1353
    %1355 = vmatmul.bf16.gmra.mxu0 %v1275
    %v1356 = vpop.f32.mrf.mxu0
    %v1357 = vadd.f32 0.0, %v1356
    %v1358 = vpop.f32.mrf.mxu0
    %v1359 = vadd.f32 0.0, %v1358
    %1360 = vmatmul.bf16.gmra.mxu0 %v1276
    %v1361 = vpop.f32.mrf.mxu0
    %v1362 = vadd.f32 0.0, %v1361
    %v1363 = vpop.f32.mrf.mxu0
    %v1364 = vadd.f32 0.0, %v1363
    %1365 = vmatmul.bf16.gmra.mxu0 %v1277
    %v1366 = vpop.f32.mrf.mxu0
    %v1367 = vadd.f32 0.0, %v1366
    %v1368 = vpop.f32.mrf.mxu0
    %v1369 = vadd.f32 0.0, %v1368
    %1370 = vdwg.mxu0
    %v1387 = vunpack.c.l.b16 %v1177
    %v1388 = vunpack.c.l.b16 %v1178
    %v1389 = vunpack.c.l.b16 %v1179
    %v1390 = vunpack.c.l.b16 %v1180
    %v1391 = vunpack.c.l.b16 %v1181
    %v1392 = vunpack.c.l.b16 %v1182
    %v1393 = vunpack.c.l.b16 %v1183
    %v1394 = vunpack.c.l.b16 %v1184
    %v1395 = vunpack.c.l.b16 %v1185
    %v1396 = vunpack.c.l.b16 %v1186
    %v1397 = vunpack.c.l.b16 %v1187
    %v1398 = vunpack.c.l.b16 %v1188
    %v1399 = vunpack.c.l.b16 %v1189
    %v1400 = vunpack.c.l.b16 %v1190
    %v1401 = vunpack.c.l.b16 %v1191
    %v1402 = vunpack.c.l.b16 %v1192
    %v1403 = vpack.c.b16 %v1388, %v1387
    %v1404 = vpack.c.b16 %v1390, %v1389
    %v1405 = vpack.c.b16 %v1392, %v1391
    %v1406 = vpack.c.b16 %v1394, %v1393
    %v1407 = vpack.c.b16 %v1396, %v1395
    %v1408 = vpack.c.b16 %v1398, %v1397
    %v1409 = vpack.c.b16 %v1400, %v1399
    %v1410 = vpack.c.b16 %v1402, %v1401
    %1419 = vmatpush.bf16.msra.mxu0 %v1410
    %1420 = vmatpush.bf16.msra.mxu0 %v1409
    %1421 = vmatpush.bf16.msra.mxu0 %v1408
    %1422 = vmatpush.bf16.msra.mxu0 %v1407
    %1423 = vmatpush.bf16.msra.mxu0 %v1406
    %1424 = vmatpush.bf16.msra.mxu0 %v1405
    %1425 = vmatpush.bf16.msra.mxu0 %v1404
    %1426 = vmatpush.bf16.msra.mxu0 %v1403
    %1427 = vmatmul.bf16.gmra.mxu0 %v1173
    %v1428 = vpop.f32.mrf.mxu0
    %v1429 = vadd.f32 %v1352, %v1428
    %v1430 = vpop.f32.mrf.mxu0
    %v1431 = vadd.f32 %v1354, %v1430
    %1432 = vmatmul.bf16.gmra.mxu0 %v1174
    %v1433 = vpop.f32.mrf.mxu0
    %v1434 = vadd.f32 %v1357, %v1433
    %v1435 = vpop.f32.mrf.mxu0
    %v1436 = vadd.f32 %v1359, %v1435
    %1437 = vmatmul.bf16.gmra.mxu0 %v1175
    %v1438 = vpop.f32.mrf.mxu0
    %v1439 = vadd.f32 %v1362, %v1438
    %v1440 = vpop.f32.mrf.mxu0
    %v1441 = vadd.f32 %v1364, %v1440
    %1442 = vmatmul.bf16.gmra.mxu0 %v1176
    %v1443 = vpop.f32.mrf.mxu0
    %v1444 = vadd.f32 %v1367, %v1443
    %v1445 = vpop.f32.mrf.mxu0
    %v1446 = vadd.f32 %v1369, %v1445
    %1447 = vdwg.mxu0
    %v1448 = vpack.c.bf16 %v1267, %v1266
    %v1449 = vpack.c.bf16 %v1269, %v1268
    %v1450 = vpack.c.bf16 %v1271, %v1270
    %v1451 = vpack.c.bf16 %v1273, %v1272
    %v1452 = vld [vmem:[#allocation5 + $0x200] sm:$0xf]
    %v1453 = vld [vmem:[#allocation5 + $0x204] sm:$0xf]
    %v1454 = vld [vmem:[#allocation5 + $0x208] sm:$0xf]
    %v1455 = vld [vmem:[#allocation5 + $0x20c] sm:$0xf]
    %v1456 = vld [vmem:[#allocation5 + $0x210] sm:$0xf]
    %v1457 = vld [vmem:[#allocation5 + $0x214] sm:$0xf]
    %v1458 = vld [vmem:[#allocation5 + $0x218] sm:$0xf]
    %v1459 = vld [vmem:[#allocation5 + $0x21c] sm:$0xf]
    %v1460 = vld [vmem:[#allocation5 + $0x220] sm:$0xf]
    %v1461 = vld [vmem:[#allocation5 + $0x224] sm:$0xf]
    %v1462 = vld [vmem:[#allocation5 + $0x228] sm:$0xf]
    %v1463 = vld [vmem:[#allocation5 + $0x22c] sm:$0xf]
    %v1464 = vld [vmem:[#allocation5 + $0x230] sm:$0xf]
    %v1465 = vld [vmem:[#allocation5 + $0x234] sm:$0xf]
    %v1466 = vld [vmem:[#allocation5 + $0x238] sm:$0xf]
    %v1467 = vld [vmem:[#allocation5 + $0x23c] sm:$0xf]
    %v1484 = vunpack.c.l.b16 %v1452
    %v1485 = vunpack.c.l.b16 %v1453
    %v1486 = vunpack.c.l.b16 %v1454
    %v1487 = vunpack.c.l.b16 %v1455
    %v1488 = vunpack.c.l.b16 %v1456
    %v1489 = vunpack.c.l.b16 %v1457
    %v1490 = vunpack.c.l.b16 %v1458
    %v1491 = vunpack.c.l.b16 %v1459
    %v1492 = vunpack.c.l.b16 %v1460
    %v1493 = vunpack.c.l.b16 %v1461
    %v1494 = vunpack.c.l.b16 %v1462
    %v1495 = vunpack.c.l.b16 %v1463
    %v1496 = vunpack.c.l.b16 %v1464
    %v1497 = vunpack.c.l.b16 %v1465
    %v1498 = vunpack.c.l.b16 %v1466
    %v1499 = vunpack.c.l.b16 %v1467
    %v1500 = vpack.c.b16 %v1485, %v1484
    %v1501 = vpack.c.b16 %v1487, %v1486
    %v1502 = vpack.c.b16 %v1489, %v1488
    %v1503 = vpack.c.b16 %v1491, %v1490
    %v1504 = vpack.c.b16 %v1493, %v1492
    %v1505 = vpack.c.b16 %v1495, %v1494
    %v1506 = vpack.c.b16 %v1497, %v1496
    %v1507 = vpack.c.b16 %v1499, %v1498
    %1516 = vmatpush.bf16.msra.mxu0 %v1507
    %1517 = vmatpush.bf16.msra.mxu0 %v1506
    %1518 = vmatpush.bf16.msra.mxu0 %v1505
    %1519 = vmatpush.bf16.msra.mxu0 %v1504
    %1520 = vmatpush.bf16.msra.mxu0 %v1503
    %1521 = vmatpush.bf16.msra.mxu0 %v1502
    %1522 = vmatpush.bf16.msra.mxu0 %v1501
    %1523 = vmatpush.bf16.msra.mxu0 %v1500
    %1524 = vmatmul.bf16.gmra.mxu0 %v1448
    %v1525 = vpop.f32.mrf.mxu0
    %v1526 = vadd.f32 0.0, %v1525
    %v1527 = vpop.f32.mrf.mxu0
    %v1528 = vadd.f32 0.0, %v1527
    %1529 = vmatmul.bf16.gmra.mxu0 %v1449
    %v1530 = vpop.f32.mrf.mxu0
    %v1531 = vadd.f32 0.0, %v1530
    %v1532 = vpop.f32.mrf.mxu0
    %v1533 = vadd.f32 0.0, %v1532
    %1534 = vmatmul.bf16.gmra.mxu0 %v1450
    %v1535 = vpop.f32.mrf.mxu0
    %v1536 = vadd.f32 0.0, %v1535
    %v1537 = vpop.f32.mrf.mxu0
    %v1538 = vadd.f32 0.0, %v1537
    %1539 = vmatmul.bf16.gmra.mxu0 %v1451
    %v1540 = vpop.f32.mrf.mxu0
    %v1541 = vadd.f32 0.0, %v1540
    %v1542 = vpop.f32.mrf.mxu0
    %v1543 = vadd.f32 0.0, %v1542
    %1544 = vdwg.mxu0
    %v1545 = vadd.f32 %v1429, %v1526
    %v1546 = vadd.f32 %v1431, %v1528
    %v1547 = vadd.f32 %v1434, %v1531
    %v1548 = vadd.f32 %v1436, %v1533
    %v1549 = vadd.f32 %v1439, %v1536
    %v1550 = vadd.f32 %v1441, %v1538
    %v1551 = vadd.f32 %v1444, %v1541
    %v1552 = vadd.f32 %v1446, %v1543
    %v1553 = vperm.slane %v1172, 0
    %v1554 = vadd.f32 %v1545, %v1553
    %v1555 = vadd.f32 %v1546, %v1553
    %v1556 = vadd.f32 %v1547, %v1553
    %v1557 = vadd.f32 %v1548, %v1553
    %v1558 = vadd.f32 %v1549, %v1553
    %v1559 = vadd.f32 %v1550, %v1553
    %v1560 = vadd.f32 %v1551, %v1553
    %v1561 = vadd.f32 %v1552, %v1553
    %v1562 = vmax.f32 %v1554, 0.0
    %v1563 = vmax.f32 %v1555, 0.0
    %v1564 = vmax.f32 %v1556, 0.0
    %v1565 = vmax.f32 %v1557, 0.0
    %v1566 = vmax.f32 %v1558, 0.0
    %v1567 = vmax.f32 %v1559, 0.0
    %v1568 = vmax.f32 %v1560, 0.0
    %v1569 = vmax.f32 %v1561, 0.0
    %v1570 = vadd.f32 %v1562, %v1563
    %v1571 = vadd.f32 %v1570, %v1564
    %v1572 = vadd.f32 %v1571, %v1565
    %v1573 = vadd.f32 %v1572, %v1566
    %v1574 = vadd.f32 %v1573, %v1567
    %v1575 = vadd.f32 %v1574, %v1568
    %v1576 = vadd.f32 %v1575, %v1569
    %v1577 = vrot.slane %v1576, 4
    %v1578 = vadd.f32 %v1576, %v1577
    %v1579 = vrot.slane %v1578, 2
    %v1580 = vadd.f32 %v1578, %v1579
    %v1581 = vrot.slane %v1580, 1
    %v1582 = vadd.f32 %v1580, %v1581
    %v1583 = vmul.f32 %v1582, %v609
    %v1584 = vsub.f32 %v1562, %v1583
    %v1585 = vsub.f32 %v1563, %v1583
    %v1586 = vsub.f32 %v1564, %v1583
    %v1587 = vsub.f32 %v1565, %v1583
    %v1588 = vsub.f32 %v1566, %v1583
    %v1589 = vsub.f32 %v1567, %v1583
    %v1590 = vsub.f32 %v1568, %v1583
    %v1591 = vsub.f32 %v1569, %v1583
    %v1592 = vmul.f32 %v1584, %v1584
    %v1593 = vmul.f32 %v1585, %v1585
    %v1594 = vmul.f32 %v1586, %v1586
    %v1595 = vmul.f32 %v1587, %v1587
    %v1596 = vmul.f32 %v1588, %v1588
    %v1597 = vmul.f32 %v1589, %v1589
    %v1598 = vmul.f32 %v1590, %v1590
    %v1599 = vmul.f32 %v1591, %v1591
    %v1600 = vadd.f32 %v1592, %v1593
    %v1601 = vadd.f32 %v1600, %v1594
    %v1602 = vadd.f32 %v1601, %v1595
    %v1603 = vadd.f32 %v1602, %v1596
    %v1604 = vadd.f32 %v1603, %v1597
    %v1605 = vadd.f32 %v1604, %v1598
    %v1606 = vadd.f32 %v1605, %v1599
    %v1607 = vrot.slane %v1606, 4
    %v1608 = vadd.f32 %v1606, %v1607
    %v1609 = vrot.slane %v1608, 2
    %v1610 = vadd.f32 %v1608, %v1609
    %v1611 = vrot.slane %v1610, 1
    %v1612 = vadd.f32 %v1610, %v1611
    %v1613 = vmul.f32 %v1612, %v609
    %v1614 = vadd.f32 %v1613, 1e-05
    %v1615 = vrsqrt.pop %v1614
    %v1616 = vmul.f32 %v1615, %v1614
    %v1617 = vmul.f32 %v1616, %v1615
    %v1618 = vmul.f32 0.5, %v1617
    %v1619 = vsub.f32 1.5, %v1618
    %v1620 = vmul.f32 %v1615, %v1619
    %vm1621 = vweird.f32 %v1614
    %vm1622 = vweird.f32 %v1615
    %vm1623 = vmor %vm1621, %vm1622
    %v1624 = vsel %vm1623, %v1615, %v1620
    %v1625 = vmul.f32 %v1172, %v1624
    %v1626 = vmul.f32 %v1583, %v1625
    %v1628 = vrot.slane %v1626, 7
    %v1630 = vsub.f32 %v1172, %v1628
    %v1631 = vperm.slane %v1625, 1
    %v1632 = vmul.f32 %v1562, %v1631
    %v1633 = vmul.f32 %v1563, %v1631
    %v1634 = vmul.f32 %v1564, %v1631
    %v1635 = vmul.f32 %v1565, %v1631
    %v1636 = vmul.f32 %v1566, %v1631
    %v1637 = vmul.f32 %v1567, %v1631
    %v1638 = vmul.f32 %v1568, %v1631
    %v1639 = vmul.f32 %v1569, %v1631
    %v1640 = vperm.slane %v1630, 2
    %v1641 = vadd.f32 %v1632, %v1640
    %v1642 = vadd.f32 %v1633, %v1640
    %v1643 = vadd.f32 %v1634, %v1640
    %v1644 = vadd.f32 %v1635, %v1640
    %v1645 = vadd.f32 %v1636, %v1640
    %v1646 = vadd.f32 %v1637, %v1640
    %v1647 = vadd.f32 %v1638, %v1640
    %v1648 = vadd.f32 %v1639, %v1640
    %s1649 = scalar_lea.vmem [#allocation7], 24
    %v1650 = vld [vmem:[%s1649] sm:$0xff]
    %v1651 = vpack.c.bf16 %v1642, %v1641
    %v1652 = vpack.c.bf16 %v1644, %v1643
    %v1653 = vpack.c.bf16 %v1646, %v1645
    %v1654 = vpack.c.bf16 %v1648, %v1647
    %v1655 = vld [vmem:[#allocation5 + $0x280] sm:$0xf]
    %v1656 = vld [vmem:[#allocation5 + $0x284] sm:$0xf]
    %v1657 = vld [vmem:[#allocation5 + $0x288] sm:$0xf]
    %v1658 = vld [vmem:[#allocation5 + $0x28c] sm:$0xf]
    %v1659 = vld [vmem:[#allocation5 + $0x290] sm:$0xf]
    %v1660 = vld [vmem:[#allocation5 + $0x294] sm:$0xf]
    %v1661 = vld [vmem:[#allocation5 + $0x298] sm:$0xf]
    %v1662 = vld [vmem:[#allocation5 + $0x29c] sm:$0xf]
    %v1663 = vld [vmem:[#allocation5 + $0x2a0] sm:$0xf]
    %v1664 = vld [vmem:[#allocation5 + $0x2a4] sm:$0xf]
    %v1665 = vld [vmem:[#allocation5 + $0x2a8] sm:$0xf]
    %v1666 = vld [vmem:[#allocation5 + $0x2ac] sm:$0xf]
    %v1667 = vld [vmem:[#allocation5 + $0x2b0] sm:$0xf]
    %v1668 = vld [vmem:[#allocation5 + $0x2b4] sm:$0xf]
    %v1669 = vld [vmem:[#allocation5 + $0x2b8] sm:$0xf]
    %v1670 = vld [vmem:[#allocation5 + $0x2bc] sm:$0xf]
    %vm1671 = vcmp.ge.s32.totalorder %v167, 8
    %vm1672 = vcmp.ge.s32.totalorder %v168, 8
    %vm1673 = vcmp.ge.s32.totalorder %v169, 8
    %vm1674 = vcmp.ge.s32.totalorder %v170, 8
    %vm1675 = vcmp.ge.s32.totalorder %v171, 8
    %vm1676 = vcmp.ge.s32.totalorder %v172, 8
    %vm1677 = vcmp.ge.s32.totalorder %v173, 8
    %vm1678 = vcmp.ge.s32.totalorder %v174, 8
    %v1679 = vsel %vm1671, 1, 0
    %v1680 = vsel %vm1672, 1, 0
    %v1681 = vsel %vm1673, 1, 0
    %v1682 = vsel %vm1674, 1, 0
    %v1683 = vsel %vm1675, 1, 0
    %v1684 = vsel %vm1676, 1, 0
    %v1685 = vsel %vm1677, 1, 0
    %v1686 = vsel %vm1678, 1, 0
    %vm1687 = vcmp.eq.s32.totalorder %v1679, 1
    %vm1688 = vcmp.eq.s32.totalorder %v1680, 1
    %vm1689 = vcmp.eq.s32.totalorder %v1681, 1
    %vm1690 = vcmp.eq.s32.totalorder %v1682, 1
    %vm1691 = vcmp.eq.s32.totalorder %v1683, 1
    %vm1692 = vcmp.eq.s32.totalorder %v1684, 1
    %vm1693 = vcmp.eq.s32.totalorder %v1685, 1
    %vm1694 = vcmp.eq.s32.totalorder %v1686, 1
    %v1695 = vsel %vm1687, %v1648, 0.0
    %v1696 = vsel %vm1688, %v1641, 0.0
    %v1697 = vsel %vm1689, %v1642, 0.0
    %v1698 = vsel %vm1690, %v1643, 0.0
    %v1699 = vsel %vm1691, %v1644, 0.0
    %v1700 = vsel %vm1692, %v1645, 0.0
    %v1701 = vsel %vm1693, %v1646, 0.0
    %v1702 = vsel %vm1694, %v1647, 0.0
    %vm1703 = vcmp.lt.s32.totalorder %v167, 24
    %vm1704 = vcmp.lt.s32.totalorder %v168, 24
    %vm1705 = vcmp.lt.s32.totalorder %v169, 24
    %vm1706 = vcmp.lt.s32.totalorder %v170, 24
    %vm1707 = vcmp.lt.s32.totalorder %v171, 24
    %vm1708 = vcmp.lt.s32.totalorder %v172, 24
    %vm1709 = vcmp.lt.s32.totalorder %v173, 24
    %vm1710 = vcmp.lt.s32.totalorder %v174, 24
    %v1711 = vsel %vm1703, 1, 0
    %v1712 = vsel %vm1704, 1, 0
    %v1713 = vsel %vm1705, 1, 0
    %v1714 = vsel %vm1706, 1, 0
    %v1715 = vsel %vm1707, 1, 0
    %v1716 = vsel %vm1708, 1, 0
    %v1717 = vsel %vm1709, 1, 0
    %v1718 = vsel %vm1710, 1, 0
    %vm1719 = vcmp.eq.s32.totalorder %v1711, 1
    %vm1720 = vcmp.eq.s32.totalorder %v1712, 1
    %vm1721 = vcmp.eq.s32.totalorder %v1713, 1
    %vm1722 = vcmp.eq.s32.totalorder %v1714, 1
    %vm1723 = vcmp.eq.s32.totalorder %v1715, 1
    %vm1724 = vcmp.eq.s32.totalorder %v1716, 1
    %vm1725 = vcmp.eq.s32.totalorder %v1717, 1
    %vm1726 = vcmp.eq.s32.totalorder %v1718, 1
    %v1727 = vsel %vm1719, %v1642, 0.0
    %v1728 = vsel %vm1720, %v1643, 0.0
    %v1729 = vsel %vm1721, %v1644, 0.0
    %v1730 = vsel %vm1722, %v1645, 0.0
    %v1731 = vsel %vm1723, %v1646, 0.0
    %v1732 = vsel %vm1724, %v1647, 0.0
    %v1733 = vsel %vm1725, %v1648, 0.0
    %v1734 = vsel %vm1726, %v1641, 0.0
    %v1735 = vpack.c.bf16 %v1696, %v1695
    %v1736 = vpack.c.bf16 %v1698, %v1697
    %v1737 = vpack.c.bf16 %v1700, %v1699
    %v1738 = vpack.c.bf16 %v1702, %v1701
    %v1739 = vld [vmem:[#allocation5 + $0x240] sm:$0xf]
    %v1740 = vld [vmem:[#allocation5 + $0x244] sm:$0xf]
    %v1741 = vld [vmem:[#allocation5 + $0x248] sm:$0xf]
    %v1742 = vld [vmem:[#allocation5 + $0x24c] sm:$0xf]
    %v1743 = vld [vmem:[#allocation5 + $0x250] sm:$0xf]
    %v1744 = vld [vmem:[#allocation5 + $0x254] sm:$0xf]
    %v1745 = vld [vmem:[#allocation5 + $0x258] sm:$0xf]
    %v1746 = vld [vmem:[#allocation5 + $0x25c] sm:$0xf]
    %v1747 = vld [vmem:[#allocation5 + $0x260] sm:$0xf]
    %v1748 = vld [vmem:[#allocation5 + $0x264] sm:$0xf]
    %v1749 = vld [vmem:[#allocation5 + $0x268] sm:$0xf]
    %v1750 = vld [vmem:[#allocation5 + $0x26c] sm:$0xf]
    %v1751 = vld [vmem:[#allocation5 + $0x270] sm:$0xf]
    %v1752 = vld [vmem:[#allocation5 + $0x274] sm:$0xf]
    %v1753 = vld [vmem:[#allocation5 + $0x278] sm:$0xf]
    %v1754 = vld [vmem:[#allocation5 + $0x27c] sm:$0xf]
    %v1771 = vunpack.c.l.b16 %v1739
    %v1772 = vunpack.c.l.b16 %v1740
    %v1773 = vunpack.c.l.b16 %v1741
    %v1774 = vunpack.c.l.b16 %v1742
    %v1775 = vunpack.c.l.b16 %v1743
    %v1776 = vunpack.c.l.b16 %v1744
    %v1777 = vunpack.c.l.b16 %v1745
    %v1778 = vunpack.c.l.b16 %v1746
    %v1779 = vunpack.c.l.b16 %v1747
    %v1780 = vunpack.c.l.b16 %v1748
    %v1781 = vunpack.c.l.b16 %v1749
    %v1782 = vunpack.c.l.b16 %v1750
    %v1783 = vunpack.c.l.b16 %v1751
    %v1784 = vunpack.c.l.b16 %v1752
    %v1785 = vunpack.c.l.b16 %v1753
    %v1786 = vunpack.c.l.b16 %v1754
    %v1787 = vpack.c.b16 %v1772, %v1771
    %v1788 = vpack.c.b16 %v1774, %v1773
    %v1789 = vpack.c.b16 %v1776, %v1775
    %v1790 = vpack.c.b16 %v1778, %v1777
    %v1791 = vpack.c.b16 %v1780, %v1779
    %v1792 = vpack.c.b16 %v1782, %v1781
    %v1793 = vpack.c.b16 %v1784, %v1783
    %v1794 = vpack.c.b16 %v1786, %v1785
    %1803 = vmatpush.bf16.msra.mxu0 %v1794
    %1804 = vmatpush.bf16.msra.mxu0 %v1793
    %1805 = vmatpush.bf16.msra.mxu0 %v1792
    %1806 = vmatpush.bf16.msra.mxu0 %v1791
    %1807 = vmatpush.bf16.msra.mxu0 %v1790
    %1808 = vmatpush.bf16.msra.mxu0 %v1789
    %1809 = vmatpush.bf16.msra.mxu0 %v1788
    %1810 = vmatpush.bf16.msra.mxu0 %v1787
    %1811 = vmatmul.bf16.gmra.mxu0 %v1735
    %v1812 = vpop.f32.mrf.mxu0
    %v1813 = vadd.f32 0.0, %v1812
    %v1814 = vpop.f32.mrf.mxu0
    %v1815 = vadd.f32 0.0, %v1814
    %1816 = vmatmul.bf16.gmra.mxu0 %v1736
    %v1817 = vpop.f32.mrf.mxu0
    %v1818 = vadd.f32 0.0, %v1817
    %v1819 = vpop.f32.mrf.mxu0
    %v1820 = vadd.f32 0.0, %v1819
    %1821 = vmatmul.bf16.gmra.mxu0 %v1737
    %v1822 = vpop.f32.mrf.mxu0
    %v1823 = vadd.f32 0.0, %v1822
    %v1824 = vpop.f32.mrf.mxu0
    %v1825 = vadd.f32 0.0, %v1824
    %1826 = vmatmul.bf16.gmra.mxu0 %v1738
    %v1827 = vpop.f32.mrf.mxu0
    %v1828 = vadd.f32 0.0, %v1827
    %v1829 = vpop.f32.mrf.mxu0
    %v1830 = vadd.f32 0.0, %v1829
    %1831 = vdwg.mxu0
    %v1848 = vunpack.c.l.b16 %v1655
    %v1849 = vunpack.c.l.b16 %v1656
    %v1850 = vunpack.c.l.b16 %v1657
    %v1851 = vunpack.c.l.b16 %v1658
    %v1852 = vunpack.c.l.b16 %v1659
    %v1853 = vunpack.c.l.b16 %v1660
    %v1854 = vunpack.c.l.b16 %v1661
    %v1855 = vunpack.c.l.b16 %v1662
    %v1856 = vunpack.c.l.b16 %v1663
    %v1857 = vunpack.c.l.b16 %v1664
    %v1858 = vunpack.c.l.b16 %v1665
    %v1859 = vunpack.c.l.b16 %v1666
    %v1860 = vunpack.c.l.b16 %v1667
    %v1861 = vunpack.c.l.b16 %v1668
    %v1862 = vunpack.c.l.b16 %v1669
    %v1863 = vunpack.c.l.b16 %v1670
    %v1864 = vpack.c.b16 %v1849, %v1848
    %v1865 = vpack.c.b16 %v1851, %v1850
    %v1866 = vpack.c.b16 %v1853, %v1852
    %v1867 = vpack.c.b16 %v1855, %v1854
    %v1868 = vpack.c.b16 %v1857, %v1856
    %v1869 = vpack.c.b16 %v1859, %v1858
    %v1870 = vpack.c.b16 %v1861, %v1860
    %v1871 = vpack.c.b16 %v1863, %v1862
    %1880 = vmatpush.bf16.msra.mxu0 %v1871
    %1881 = vmatpush.bf16.msra.mxu0 %v1870
    %1882 = vmatpush.bf16.msra.mxu0 %v1869
    %1883 = vmatpush.bf16.msra.mxu0 %v1868
    %1884 = vmatpush.bf16.msra.mxu0 %v1867
    %1885 = vmatpush.bf16.msra.mxu0 %v1866
    %1886 = vmatpush.bf16.msra.mxu0 %v1865
    %1887 = vmatpush.bf16.msra.mxu0 %v1864
    %1888 = vmatmul.bf16.gmra.mxu0 %v1651
    %v1889 = vpop.f32.mrf.mxu0
    %v1890 = vadd.f32 %v1813, %v1889
    %v1891 = vpop.f32.mrf.mxu0
    %v1892 = vadd.f32 %v1815, %v1891
    %1893 = vmatmul.bf16.gmra.mxu0 %v1652
    %v1894 = vpop.f32.mrf.mxu0
    %v1895 = vadd.f32 %v1818, %v1894
    %v1896 = vpop.f32.mrf.mxu0
    %v1897 = vadd.f32 %v1820, %v1896
    %1898 = vmatmul.bf16.gmra.mxu0 %v1653
    %v1899 = vpop.f32.mrf.mxu0
    %v1900 = vadd.f32 %v1823, %v1899
    %v1901 = vpop.f32.mrf.mxu0
    %v1902 = vadd.f32 %v1825, %v1901
    %1903 = vmatmul.bf16.gmra.mxu0 %v1654
    %v1904 = vpop.f32.mrf.mxu0
    %v1905 = vadd.f32 %v1828, %v1904
    %v1906 = vpop.f32.mrf.mxu0
    %v1907 = vadd.f32 %v1830, %v1906
    %1908 = vdwg.mxu0
    %v1909 = vpack.c.bf16 %v1728, %v1727
    %v1910 = vpack.c.bf16 %v1730, %v1729
    %v1911 = vpack.c.bf16 %v1732, %v1731
    %v1912 = vpack.c.bf16 %v1734, %v1733
    %v1913 = vld [vmem:[#allocation5 + $0x2c0] sm:$0xf]
    %v1914 = vld [vmem:[#allocation5 + $0x2c4] sm:$0xf]
    %v1915 = vld [vmem:[#allocation5 + $0x2c8] sm:$0xf]
    %v1916 = vld [vmem:[#allocation5 + $0x2cc] sm:$0xf]
    %v1917 = vld [vmem:[#allocation5 + $0x2d0] sm:$0xf]
    %v1918 = vld [vmem:[#allocation5 + $0x2d4] sm:$0xf]
    %v1919 = vld [vmem:[#allocation5 + $0x2d8] sm:$0xf]
    %v1920 = vld [vmem:[#allocation5 + $0x2dc] sm:$0xf]
    %v1921 = vld [vmem:[#allocation5 + $0x2e0] sm:$0xf]
    %v1922 = vld [vmem:[#allocation5 + $0x2e4] sm:$0xf]
    %v1923 = vld [vmem:[#allocation5 + $0x2e8] sm:$0xf]
    %v1924 = vld [vmem:[#allocation5 + $0x2ec] sm:$0xf]
    %v1925 = vld [vmem:[#allocation5 + $0x2f0] sm:$0xf]
    %v1926 = vld [vmem:[#allocation5 + $0x2f4] sm:$0xf]
    %v1927 = vld [vmem:[#allocation5 + $0x2f8] sm:$0xf]
    %v1928 = vld [vmem:[#allocation5 + $0x2fc] sm:$0xf]
    %v1945 = vunpack.c.l.b16 %v1913
    %v1946 = vunpack.c.l.b16 %v1914
    %v1947 = vunpack.c.l.b16 %v1915
    %v1948 = vunpack.c.l.b16 %v1916
    %v1949 = vunpack.c.l.b16 %v1917
    %v1950 = vunpack.c.l.b16 %v1918
    %v1951 = vunpack.c.l.b16 %v1919
    %v1952 = vunpack.c.l.b16 %v1920
    %v1953 = vunpack.c.l.b16 %v1921
    %v1954 = vunpack.c.l.b16 %v1922
    %v1955 = vunpack.c.l.b16 %v1923
    %v1956 = vunpack.c.l.b16 %v1924
    %v1957 = vunpack.c.l.b16 %v1925
    %v1958 = vunpack.c.l.b16 %v1926
    %v1959 = vunpack.c.l.b16 %v1927
    %v1960 = vunpack.c.l.b16 %v1928
    %v1961 = vpack.c.b16 %v1946, %v1945
    %v1962 = vpack.c.b16 %v1948, %v1947
    %v1963 = vpack.c.b16 %v1950, %v1949
    %v1964 = vpack.c.b16 %v1952, %v1951
    %v1965 = vpack.c.b16 %v1954, %v1953
    %v1966 = vpack.c.b16 %v1956, %v1955
    %v1967 = vpack.c.b16 %v1958, %v1957
    %v1968 = vpack.c.b16 %v1960, %v1959
    %1977 = vmatpush.bf16.msra.mxu0 %v1968
    %1978 = vmatpush.bf16.msra.mxu0 %v1967
    %1979 = vmatpush.bf16.msra.mxu0 %v1966
    %1980 = vmatpush.bf16.msra.mxu0 %v1965
    %1981 = vmatpush.bf16.msra.mxu0 %v1964
    %1982 = vmatpush.bf16.msra.mxu0 %v1963
    %1983 = vmatpush.bf16.msra.mxu0 %v1962
    %1984 = vmatpush.bf16.msra.mxu0 %v1961
    %1985 = vmatmul.bf16.gmra.mxu0 %v1909
    %v1986 = vpop.f32.mrf.mxu0
    %v1987 = vadd.f32 0.0, %v1986
    %v1988 = vpop.f32.mrf.mxu0
    %v1989 = vadd.f32 0.0, %v1988
    %1990 = vmatmul.bf16.gmra.mxu0 %v1910
    %v1991 = vpop.f32.mrf.mxu0
    %v1992 = vadd.f32 0.0, %v1991
    %v1993 = vpop.f32.mrf.mxu0
    %v1994 = vadd.f32 0.0, %v1993
    %1995 = vmatmul.bf16.gmra.mxu0 %v1911
    %v1996 = vpop.f32.mrf.mxu0
    %v1997 = vadd.f32 0.0, %v1996
    %v1998 = vpop.f32.mrf.mxu0
    %v1999 = vadd.f32 0.0, %v1998
    %2000 = vmatmul.bf16.gmra.mxu0 %v1912
    %v2001 = vpop.f32.mrf.mxu0
    %v2002 = vadd.f32 0.0, %v2001
    %v2003 = vpop.f32.mrf.mxu0
    %v2004 = vadd.f32 0.0, %v2003
    %2005 = vdwg.mxu0
    %v2006 = vadd.f32 %v1890, %v1987
    %v2007 = vadd.f32 %v1892, %v1989
    %v2008 = vadd.f32 %v1895, %v1992
    %v2009 = vadd.f32 %v1897, %v1994
    %v2010 = vadd.f32 %v1900, %v1997
    %v2011 = vadd.f32 %v1902, %v1999
    %v2012 = vadd.f32 %v1905, %v2002
    %v2013 = vadd.f32 %v1907, %v2004
    %v2014 = vperm.slane %v1650, 0
    %v2015 = vadd.f32 %v2006, %v2014
    %v2016 = vadd.f32 %v2007, %v2014
    %v2017 = vadd.f32 %v2008, %v2014
    %v2018 = vadd.f32 %v2009, %v2014
    %v2019 = vadd.f32 %v2010, %v2014
    %v2020 = vadd.f32 %v2011, %v2014
    %v2021 = vadd.f32 %v2012, %v2014
    %v2022 = vadd.f32 %v2013, %v2014
    %v2023 = vmax.f32 %v2015, 0.0
    %v2024 = vmax.f32 %v2016, 0.0
    %v2025 = vmax.f32 %v2017, 0.0
    %v2026 = vmax.f32 %v2018, 0.0
    %v2027 = vmax.f32 %v2019, 0.0
    %v2028 = vmax.f32 %v2020, 0.0
    %v2029 = vmax.f32 %v2021, 0.0
    %v2030 = vmax.f32 %v2022, 0.0
    %v2031 = vadd.f32 %v2023, %v2024
    %v2032 = vadd.f32 %v2031, %v2025
    %v2033 = vadd.f32 %v2032, %v2026
    %v2034 = vadd.f32 %v2033, %v2027
    %v2035 = vadd.f32 %v2034, %v2028
    %v2036 = vadd.f32 %v2035, %v2029
    %v2037 = vadd.f32 %v2036, %v2030
    %v2038 = vrot.slane %v2037, 4
    %v2039 = vadd.f32 %v2037, %v2038
    %v2040 = vrot.slane %v2039, 2
    %v2041 = vadd.f32 %v2039, %v2040
    %v2042 = vrot.slane %v2041, 1
    %v2043 = vadd.f32 %v2041, %v2042
    %v2044 = vmul.f32 %v2043, %v609
    %v2045 = vsub.f32 %v2023, %v2044
    %v2046 = vsub.f32 %v2024, %v2044
    %v2047 = vsub.f32 %v2025, %v2044
    %v2048 = vsub.f32 %v2026, %v2044
    %v2049 = vsub.f32 %v2027, %v2044
    %v2050 = vsub.f32 %v2028, %v2044
    %v2051 = vsub.f32 %v2029, %v2044
    %v2052 = vsub.f32 %v2030, %v2044
    %v2053 = vmul.f32 %v2045, %v2045
    %v2054 = vmul.f32 %v2046, %v2046
    %v2055 = vmul.f32 %v2047, %v2047
    %v2056 = vmul.f32 %v2048, %v2048
    %v2057 = vmul.f32 %v2049, %v2049
    %v2058 = vmul.f32 %v2050, %v2050
    %v2059 = vmul.f32 %v2051, %v2051
    %v2060 = vmul.f32 %v2052, %v2052
    %v2061 = vadd.f32 %v2053, %v2054
    %v2062 = vadd.f32 %v2061, %v2055
    %v2063 = vadd.f32 %v2062, %v2056
    %v2064 = vadd.f32 %v2063, %v2057
    %v2065 = vadd.f32 %v2064, %v2058
    %v2066 = vadd.f32 %v2065, %v2059
    %v2067 = vadd.f32 %v2066, %v2060
    %v2068 = vrot.slane %v2067, 4
    %v2069 = vadd.f32 %v2067, %v2068
    %v2070 = vrot.slane %v2069, 2
    %v2071 = vadd.f32 %v2069, %v2070
    %v2072 = vrot.slane %v2071, 1
    %v2073 = vadd.f32 %v2071, %v2072
    %v2074 = vmul.f32 %v2073, %v609
    %v2075 = vadd.f32 %v2074, 1e-05
    %v2076 = vrsqrt.pop %v2075
    %v2077 = vmul.f32 %v2076, %v2075
    %v2078 = vmul.f32 %v2077, %v2076
    %v2079 = vmul.f32 0.5, %v2078
    %v2080 = vsub.f32 1.5, %v2079
    %v2081 = vmul.f32 %v2076, %v2080
    %vm2082 = vweird.f32 %v2075
    %vm2083 = vweird.f32 %v2076
    %vm2084 = vmor %vm2082, %vm2083
    %v2085 = vsel %vm2084, %v2076, %v2081
    %v2086 = vmul.f32 %v1650, %v2085
    %v2087 = vmul.f32 %v2044, %v2086
    %v2089 = vrot.slane %v2087, 7
    %v2091 = vsub.f32 %v1650, %v2089
    %v2092 = vperm.slane %v2086, 1
    %v2093 = vmul.f32 %v2023, %v2092
    %v2094 = vmul.f32 %v2024, %v2092
    %v2095 = vmul.f32 %v2025, %v2092
    %v2096 = vmul.f32 %v2026, %v2092
    %v2097 = vmul.f32 %v2027, %v2092
    %v2098 = vmul.f32 %v2028, %v2092
    %v2099 = vmul.f32 %v2029, %v2092
    %v2100 = vmul.f32 %v2030, %v2092
    %v2101 = vperm.slane %v2091, 2
    %v2102 = vadd.f32 %v2093, %v2101
    %v2103 = vadd.f32 %v2094, %v2101
    %v2104 = vadd.f32 %v2095, %v2101
    %v2105 = vadd.f32 %v2096, %v2101
    %v2106 = vadd.f32 %v2097, %v2101
    %v2107 = vadd.f32 %v2098, %v2101
    %v2108 = vadd.f32 %v2099, %v2101
    %v2109 = vadd.f32 %v2100, %v2101
    %s2110 = scalar_lea.vmem [#allocation7], 32
    %v2111 = vld [vmem:[%s2110] sm:$0xff]
    %v2112 = vpack.c.bf16 %v2103, %v2102
    %v2113 = vpack.c.bf16 %v2105, %v2104
    %v2114 = vpack.c.bf16 %v2107, %v2106
    %v2115 = vpack.c.bf16 %v2109, %v2108
    %v2116 = vld [vmem:[#allocation5 + $0x340] sm:$0xf]
    %v2117 = vld [vmem:[#allocation5 + $0x344] sm:$0xf]
    %v2118 = vld [vmem:[#allocation5 + $0x348] sm:$0xf]
    %v2119 = vld [vmem:[#allocation5 + $0x34c] sm:$0xf]
    %v2120 = vld [vmem:[#allocation5 + $0x350] sm:$0xf]
    %v2121 = vld [vmem:[#allocation5 + $0x354] sm:$0xf]
    %v2122 = vld [vmem:[#allocation5 + $0x358] sm:$0xf]
    %v2123 = vld [vmem:[#allocation5 + $0x35c] sm:$0xf]
    %v2124 = vld [vmem:[#allocation5 + $0x360] sm:$0xf]
    %v2125 = vld [vmem:[#allocation5 + $0x364] sm:$0xf]
    %v2126 = vld [vmem:[#allocation5 + $0x368] sm:$0xf]
    %v2127 = vld [vmem:[#allocation5 + $0x36c] sm:$0xf]
    %v2128 = vld [vmem:[#allocation5 + $0x370] sm:$0xf]
    %v2129 = vld [vmem:[#allocation5 + $0x374] sm:$0xf]
    %v2130 = vld [vmem:[#allocation5 + $0x378] sm:$0xf]
    %v2131 = vld [vmem:[#allocation5 + $0x37c] sm:$0xf]
    %vm2132 = vcmp.ge.s32.totalorder %v167, 16
    %vm2133 = vcmp.ge.s32.totalorder %v168, 16
    %vm2134 = vcmp.ge.s32.totalorder %v169, 16
    %vm2135 = vcmp.ge.s32.totalorder %v170, 16
    %vm2136 = vcmp.ge.s32.totalorder %v171, 16
    %vm2137 = vcmp.ge.s32.totalorder %v172, 16
    %vm2138 = vcmp.ge.s32.totalorder %v173, 16
    %vm2139 = vcmp.ge.s32.totalorder %v174, 16
    %v2140 = vsel %vm2132, 1, 0
    %v2141 = vsel %vm2133, 1, 0
    %v2142 = vsel %vm2134, 1, 0
    %v2143 = vsel %vm2135, 1, 0
    %v2144 = vsel %vm2136, 1, 0
    %v2145 = vsel %vm2137, 1, 0
    %v2146 = vsel %vm2138, 1, 0
    %v2147 = vsel %vm2139, 1, 0
    %vm2148 = vcmp.eq.s32.totalorder %v2140, 1
    %vm2149 = vcmp.eq.s32.totalorder %v2141, 1
    %vm2150 = vcmp.eq.s32.totalorder %v2142, 1
    %vm2151 = vcmp.eq.s32.totalorder %v2143, 1
    %vm2152 = vcmp.eq.s32.totalorder %v2144, 1
    %vm2153 = vcmp.eq.s32.totalorder %v2145, 1
    %vm2154 = vcmp.eq.s32.totalorder %v2146, 1
    %vm2155 = vcmp.eq.s32.totalorder %v2147, 1
    %v2156 = vsel %vm2148, %v2108, 0.0
    %v2157 = vsel %vm2149, %v2109, 0.0
    %v2158 = vsel %vm2150, %v2102, 0.0
    %v2159 = vsel %vm2151, %v2103, 0.0
    %v2160 = vsel %vm2152, %v2104, 0.0
    %v2161 = vsel %vm2153, %v2105, 0.0
    %v2162 = vsel %vm2154, %v2106, 0.0
    %v2163 = vsel %vm2155, %v2107, 0.0
    %vm2164 = vcmp.lt.s32.totalorder %v167, 16
    %vm2165 = vcmp.lt.s32.totalorder %v168, 16
    %vm2166 = vcmp.lt.s32.totalorder %v169, 16
    %vm2167 = vcmp.lt.s32.totalorder %v170, 16
    %vm2168 = vcmp.lt.s32.totalorder %v171, 16
    %vm2169 = vcmp.lt.s32.totalorder %v172, 16
    %vm2170 = vcmp.lt.s32.totalorder %v173, 16
    %vm2171 = vcmp.lt.s32.totalorder %v174, 16
    %v2172 = vsel %vm2164, 1, 0
    %v2173 = vsel %vm2165, 1, 0
    %v2174 = vsel %vm2166, 1, 0
    %v2175 = vsel %vm2167, 1, 0
    %v2176 = vsel %vm2168, 1, 0
    %v2177 = vsel %vm2169, 1, 0
    %v2178 = vsel %vm2170, 1, 0
    %v2179 = vsel %vm2171, 1, 0
    %vm2180 = vcmp.eq.s32.totalorder %v2172, 1
    %vm2181 = vcmp.eq.s32.totalorder %v2173, 1
    %vm2182 = vcmp.eq.s32.totalorder %v2174, 1
    %vm2183 = vcmp.eq.s32.totalorder %v2175, 1
    %vm2184 = vcmp.eq.s32.totalorder %v2176, 1
    %vm2185 = vcmp.eq.s32.totalorder %v2177, 1
    %vm2186 = vcmp.eq.s32.totalorder %v2178, 1
    %vm2187 = vcmp.eq.s32.totalorder %v2179, 1
    %v2188 = vsel %vm2180, %v2104, 0.0
    %v2189 = vsel %vm2181, %v2105, 0.0
    %v2190 = vsel %vm2182, %v2106, 0.0
    %v2191 = vsel %vm2183, %v2107, 0.0
    %v2192 = vsel %vm2184, %v2108, 0.0
    %v2193 = vsel %vm2185, %v2109, 0.0
    %v2194 = vsel %vm2186, %v2102, 0.0
    %v2195 = vsel %vm2187, %v2103, 0.0
    %v2196 = vpack.c.bf16 %v2157, %v2156
    %v2197 = vpack.c.bf16 %v2159, %v2158
    %v2198 = vpack.c.bf16 %v2161, %v2160
    %v2199 = vpack.c.bf16 %v2163, %v2162
    %v2200 = vld [vmem:[#allocation5 + $0x300] sm:$0xf]
    %v2201 = vld [vmem:[#allocation5 + $0x304] sm:$0xf]
    %v2202 = vld [vmem:[#allocation5 + $0x308] sm:$0xf]
    %v2203 = vld [vmem:[#allocation5 + $0x30c] sm:$0xf]
    %v2204 = vld [vmem:[#allocation5 + $0x310] sm:$0xf]
    %v2205 = vld [vmem:[#allocation5 + $0x314] sm:$0xf]
    %v2206 = vld [vmem:[#allocation5 + $0x318] sm:$0xf]
    %v2207 = vld [vmem:[#allocation5 + $0x31c] sm:$0xf]
    %v2208 = vld [vmem:[#allocation5 + $0x320] sm:$0xf]
    %v2209 = vld [vmem:[#allocation5 + $0x324] sm:$0xf]
    %v2210 = vld [vmem:[#allocation5 + $0x328] sm:$0xf]
    %v2211 = vld [vmem:[#allocation5 + $0x32c] sm:$0xf]
    %v2212 = vld [vmem:[#allocation5 + $0x330] sm:$0xf]
    %v2213 = vld [vmem:[#allocation5 + $0x334] sm:$0xf]
    %v2214 = vld [vmem:[#allocation5 + $0x338] sm:$0xf]
    %v2215 = vld [vmem:[#allocation5 + $0x33c] sm:$0xf]
    %v2232 = vunpack.c.l.b16 %v2200
    %v2233 = vunpack.c.l.b16 %v2201
    %v2234 = vunpack.c.l.b16 %v2202
    %v2235 = vunpack.c.l.b16 %v2203
    %v2236 = vunpack.c.l.b16 %v2204
    %v2237 = vunpack.c.l.b16 %v2205
    %v2238 = vunpack.c.l.b16 %v2206
    %v2239 = vunpack.c.l.b16 %v2207
    %v2240 = vunpack.c.l.b16 %v2208
    %v2241 = vunpack.c.l.b16 %v2209
    %v2242 = vunpack.c.l.b16 %v2210
    %v2243 = vunpack.c.l.b16 %v2211
    %v2244 = vunpack.c.l.b16 %v2212
    %v2245 = vunpack.c.l.b16 %v2213
    %v2246 = vunpack.c.l.b16 %v2214
    %v2247 = vunpack.c.l.b16 %v2215
    %v2248 = vpack.c.b16 %v2233, %v2232
    %v2249 = vpack.c.b16 %v2235, %v2234
    %v2250 = vpack.c.b16 %v2237, %v2236
    %v2251 = vpack.c.b16 %v2239, %v2238
    %v2252 = vpack.c.b16 %v2241, %v2240
    %v2253 = vpack.c.b16 %v2243, %v2242
    %v2254 = vpack.c.b16 %v2245, %v2244
    %v2255 = vpack.c.b16 %v2247, %v2246
    %2264 = vmatpush.bf16.msra.mxu0 %v2255
    %2265 = vmatpush.bf16.msra.mxu0 %v2254
    %2266 = vmatpush.bf16.msra.mxu0 %v2253
    %2267 = vmatpush.bf16.msra.mxu0 %v2252
    %2268 = vmatpush.bf16.msra.mxu0 %v2251
    %2269 = vmatpush.bf16.msra.mxu0 %v2250
    %2270 = vmatpush.bf16.msra.mxu0 %v2249
    %2271 = vmatpush.bf16.msra.mxu0 %v2248
    %2272 = vmatmul.bf16.gmra.mxu0 %v2196
    %v2273 = vpop.f32.mrf.mxu0
    %v2274 = vadd.f32 0.0, %v2273
    %v2275 = vpop.f32.mrf.mxu0
    %v2276 = vadd.f32 0.0, %v2275
    %2277 = vmatmul.bf16.gmra.mxu0 %v2197
    %v2278 = vpop.f32.mrf.mxu0
    %v2279 = vadd.f32 0.0, %v2278
    %v2280 = vpop.f32.mrf.mxu0
    %v2281 = vadd.f32 0.0, %v2280
    %2282 = vmatmul.bf16.gmra.mxu0 %v2198
    %v2283 = vpop.f32.mrf.mxu0
    %v2284 = vadd.f32 0.0, %v2283
    %v2285 = vpop.f32.mrf.mxu0
    %v2286 = vadd.f32 0.0, %v2285
    %2287 = vmatmul.bf16.gmra.mxu0 %v2199
    %v2288 = vpop.f32.mrf.mxu0
    %v2289 = vadd.f32 0.0, %v2288
    %v2290 = vpop.f32.mrf.mxu0
    %v2291 = vadd.f32 0.0, %v2290
    %2292 = vdwg.mxu0
    %v2309 = vunpack.c.l.b16 %v2116
    %v2310 = vunpack.c.l.b16 %v2117
    %v2311 = vunpack.c.l.b16 %v2118
    %v2312 = vunpack.c.l.b16 %v2119
    %v2313 = vunpack.c.l.b16 %v2120
    %v2314 = vunpack.c.l.b16 %v2121
    %v2315 = vunpack.c.l.b16 %v2122
    %v2316 = vunpack.c.l.b16 %v2123
    %v2317 = vunpack.c.l.b16 %v2124
    %v2318 = vunpack.c.l.b16 %v2125
    %v2319 = vunpack.c.l.b16 %v2126
    %v2320 = vunpack.c.l.b16 %v2127
    %v2321 = vunpack.c.l.b16 %v2128
    %v2322 = vunpack.c.l.b16 %v2129
    %v2323 = vunpack.c.l.b16 %v2130
    %v2324 = vunpack.c.l.b16 %v2131
    %v2325 = vpack.c.b16 %v2310, %v2309
    %v2326 = vpack.c.b16 %v2312, %v2311
    %v2327 = vpack.c.b16 %v2314, %v2313
    %v2328 = vpack.c.b16 %v2316, %v2315
    %v2329 = vpack.c.b16 %v2318, %v2317
    %v2330 = vpack.c.b16 %v2320, %v2319
    %v2331 = vpack.c.b16 %v2322, %v2321
    %v2332 = vpack.c.b16 %v2324, %v2323
    %2341 = vmatpush.bf16.msra.mxu0 %v2332
    %2342 = vmatpush.bf16.msra.mxu0 %v2331
    %2343 = vmatpush.bf16.msra.mxu0 %v2330
    %2344 = vmatpush.bf16.msra.mxu0 %v2329
    %2345 = vmatpush.bf16.msra.mxu0 %v2328
    %2346 = vmatpush.bf16.msra.mxu0 %v2327
    %2347 = vmatpush.bf16.msra.mxu0 %v2326
    %2348 = vmatpush.bf16.msra.mxu0 %v2325
    %2349 = vmatmul.bf16.gmra.mxu0 %v2112
    %v2350 = vpop.f32.mrf.mxu0
    %v2351 = vadd.f32 %v2274, %v2350
    %v2352 = vpop.f32.mrf.mxu0
    %v2353 = vadd.f32 %v2276, %v2352
    %2354 = vmatmul.bf16.gmra.mxu0 %v2113
    %v2355 = vpop.f32.mrf.mxu0
    %v2356 = vadd.f32 %v2279, %v2355
    %v2357 = vpop.f32.mrf.mxu0
    %v2358 = vadd.f32 %v2281, %v2357
    %2359 = vmatmul.bf16.gmra.mxu0 %v2114
    %v2360 = vpop.f32.mrf.mxu0
    %v2361 = vadd.f32 %v2284, %v2360
    %v2362 = vpop.f32.mrf.mxu0
    %v2363 = vadd.f32 %v2286, %v2362
    %2364 = vmatmul.bf16.gmra.mxu0 %v2115
    %v2365 = vpop.f32.mrf.mxu0
    %v2366 = vadd.f32 %v2289, %v2365
    %v2367 = vpop.f32.mrf.mxu0
    %v2368 = vadd.f32 %v2291, %v2367
    %2369 = vdwg.mxu0
    %v2370 = vpack.c.bf16 %v2189, %v2188
    %v2371 = vpack.c.bf16 %v2191, %v2190
    %v2372 = vpack.c.bf16 %v2193, %v2192
    %v2373 = vpack.c.bf16 %v2195, %v2194
    %v2374 = vld [vmem:[#allocation5 + $0x380] sm:$0xf]
    %v2375 = vld [vmem:[#allocation5 + $0x384] sm:$0xf]
    %v2376 = vld [vmem:[#allocation5 + $0x388] sm:$0xf]
    %v2377 = vld [vmem:[#allocation5 + $0x38c] sm:$0xf]
    %v2378 = vld [vmem:[#allocation5 + $0x390] sm:$0xf]
    %v2379 = vld [vmem:[#allocation5 + $0x394] sm:$0xf]
    %v2380 = vld [vmem:[#allocation5 + $0x398] sm:$0xf]
    %v2381 = vld [vmem:[#allocation5 + $0x39c] sm:$0xf]
    %v2382 = vld [vmem:[#allocation5 + $0x3a0] sm:$0xf]
    %v2383 = vld [vmem:[#allocation5 + $0x3a4] sm:$0xf]
    %v2384 = vld [vmem:[#allocation5 + $0x3a8] sm:$0xf]
    %v2385 = vld [vmem:[#allocation5 + $0x3ac] sm:$0xf]
    %v2386 = vld [vmem:[#allocation5 + $0x3b0] sm:$0xf]
    %v2387 = vld [vmem:[#allocation5 + $0x3b4] sm:$0xf]
    %v2388 = vld [vmem:[#allocation5 + $0x3b8] sm:$0xf]
    %v2389 = vld [vmem:[#allocation5 + $0x3bc] sm:$0xf]
    %v2406 = vunpack.c.l.b16 %v2374
    %v2407 = vunpack.c.l.b16 %v2375
    %v2408 = vunpack.c.l.b16 %v2376
    %v2409 = vunpack.c.l.b16 %v2377
    %v2410 = vunpack.c.l.b16 %v2378
    %v2411 = vunpack.c.l.b16 %v2379
    %v2412 = vunpack.c.l.b16 %v2380
    %v2413 = vunpack.c.l.b16 %v2381
    %v2414 = vunpack.c.l.b16 %v2382
    %v2415 = vunpack.c.l.b16 %v2383
    %v2416 = vunpack.c.l.b16 %v2384
    %v2417 = vunpack.c.l.b16 %v2385
    %v2418 = vunpack.c.l.b16 %v2386
    %v2419 = vunpack.c.l.b16 %v2387
    %v2420 = vunpack.c.l.b16 %v2388
    %v2421 = vunpack.c.l.b16 %v2389
    %v2422 = vpack.c.b16 %v2407, %v2406
    %v2423 = vpack.c.b16 %v2409, %v2408
    %v2424 = vpack.c.b16 %v2411, %v2410
    %v2425 = vpack.c.b16 %v2413, %v2412
    %v2426 = vpack.c.b16 %v2415, %v2414
    %v2427 = vpack.c.b16 %v2417, %v2416
    %v2428 = vpack.c.b16 %v2419, %v2418
    %v2429 = vpack.c.b16 %v2421, %v2420
    %2438 = vmatpush.bf16.msra.mxu0 %v2429
    %2439 = vmatpush.bf16.msra.mxu0 %v2428
    %2440 = vmatpush.bf16.msra.mxu0 %v2427
    %2441 = vmatpush.bf16.msra.mxu0 %v2426
    %2442 = vmatpush.bf16.msra.mxu0 %v2425
    %2443 = vmatpush.bf16.msra.mxu0 %v2424
    %2444 = vmatpush.bf16.msra.mxu0 %v2423
    %2445 = vmatpush.bf16.msra.mxu0 %v2422
    %2446 = vmatmul.bf16.gmra.mxu0 %v2370
    %v2447 = vpop.f32.mrf.mxu0
    %v2448 = vadd.f32 0.0, %v2447
    %v2449 = vpop.f32.mrf.mxu0
    %v2450 = vadd.f32 0.0, %v2449
    %2451 = vmatmul.bf16.gmra.mxu0 %v2371
    %v2452 = vpop.f32.mrf.mxu0
    %v2453 = vadd.f32 0.0, %v2452
    %v2454 = vpop.f32.mrf.mxu0
    %v2455 = vadd.f32 0.0, %v2454
    %2456 = vmatmul.bf16.gmra.mxu0 %v2372
    %v2457 = vpop.f32.mrf.mxu0
    %v2458 = vadd.f32 0.0, %v2457
    %v2459 = vpop.f32.mrf.mxu0
    %v2460 = vadd.f32 0.0, %v2459
    %2461 = vmatmul.bf16.gmra.mxu0 %v2373
    %v2462 = vpop.f32.mrf.mxu0
    %v2463 = vadd.f32 0.0, %v2462
    %v2464 = vpop.f32.mrf.mxu0
    %v2465 = vadd.f32 0.0, %v2464
    %2466 = vdwg.mxu0
    %v2467 = vadd.f32 %v2351, %v2448
    %v2468 = vadd.f32 %v2353, %v2450
    %v2469 = vadd.f32 %v2356, %v2453
    %v2470 = vadd.f32 %v2358, %v2455
    %v2471 = vadd.f32 %v2361, %v2458
    %v2472 = vadd.f32 %v2363, %v2460
    %v2473 = vadd.f32 %v2366, %v2463
    %v2474 = vadd.f32 %v2368, %v2465
    %v2475 = vperm.slane %v2111, 0
    %v2476 = vadd.f32 %v2467, %v2475
    %v2477 = vadd.f32 %v2468, %v2475
    %v2478 = vadd.f32 %v2469, %v2475
    %v2479 = vadd.f32 %v2470, %v2475
    %v2480 = vadd.f32 %v2471, %v2475
    %v2481 = vadd.f32 %v2472, %v2475
    %v2482 = vadd.f32 %v2473, %v2475
    %v2483 = vadd.f32 %v2474, %v2475
    %v2484 = vmax.f32 %v2476, 0.0
    %v2485 = vmax.f32 %v2477, 0.0
    %v2486 = vmax.f32 %v2478, 0.0
    %v2487 = vmax.f32 %v2479, 0.0
    %v2488 = vmax.f32 %v2480, 0.0
    %v2489 = vmax.f32 %v2481, 0.0
    %v2490 = vmax.f32 %v2482, 0.0
    %v2491 = vmax.f32 %v2483, 0.0
    %v2492 = vadd.f32 %v2484, %v2485
    %v2493 = vadd.f32 %v2492, %v2486
    %v2494 = vadd.f32 %v2493, %v2487
    %v2495 = vadd.f32 %v2494, %v2488
    %v2496 = vadd.f32 %v2495, %v2489
    %v2497 = vadd.f32 %v2496, %v2490
    %v2498 = vadd.f32 %v2497, %v2491
    %v2499 = vrot.slane %v2498, 4
    %v2500 = vadd.f32 %v2498, %v2499
    %v2501 = vrot.slane %v2500, 2
    %v2502 = vadd.f32 %v2500, %v2501
    %v2503 = vrot.slane %v2502, 1
    %v2504 = vadd.f32 %v2502, %v2503
    %v2505 = vmul.f32 %v2504, %v609
    %v2506 = vsub.f32 %v2484, %v2505
    %v2507 = vsub.f32 %v2485, %v2505
    %v2508 = vsub.f32 %v2486, %v2505
    %v2509 = vsub.f32 %v2487, %v2505
    %v2510 = vsub.f32 %v2488, %v2505
    %v2511 = vsub.f32 %v2489, %v2505
    %v2512 = vsub.f32 %v2490, %v2505
    %v2513 = vsub.f32 %v2491, %v2505
    %v2514 = vmul.f32 %v2506, %v2506
    %v2515 = vmul.f32 %v2507, %v2507
    %v2516 = vmul.f32 %v2508, %v2508
    %v2517 = vmul.f32 %v2509, %v2509
    %v2518 = vmul.f32 %v2510, %v2510
    %v2519 = vmul.f32 %v2511, %v2511
    %v2520 = vmul.f32 %v2512, %v2512
    %v2521 = vmul.f32 %v2513, %v2513
    %v2522 = vadd.f32 %v2514, %v2515
    %v2523 = vadd.f32 %v2522, %v2516
    %v2524 = vadd.f32 %v2523, %v2517
    %v2525 = vadd.f32 %v2524, %v2518
    %v2526 = vadd.f32 %v2525, %v2519
    %v2527 = vadd.f32 %v2526, %v2520
    %v2528 = vadd.f32 %v2527, %v2521
    %v2529 = vrot.slane %v2528, 4
    %v2530 = vadd.f32 %v2528, %v2529
    %v2531 = vrot.slane %v2530, 2
    %v2532 = vadd.f32 %v2530, %v2531
    %v2533 = vrot.slane %v2532, 1
    %v2534 = vadd.f32 %v2532, %v2533
    %v2535 = vmul.f32 %v2534, %v609
    %v2536 = vadd.f32 %v2535, 1e-05
    %v2537 = vrsqrt.pop %v2536
    %v2538 = vmul.f32 %v2537, %v2536
    %v2539 = vmul.f32 %v2538, %v2537
    %v2540 = vmul.f32 0.5, %v2539
    %v2541 = vsub.f32 1.5, %v2540
    %v2542 = vmul.f32 %v2537, %v2541
    %vm2543 = vweird.f32 %v2536
    %vm2544 = vweird.f32 %v2537
    %vm2545 = vmor %vm2543, %vm2544
    %v2546 = vsel %vm2545, %v2537, %v2542
    %v2547 = vmul.f32 %v2111, %v2546
    %v2548 = vmul.f32 %v2505, %v2547
    %v2550 = vrot.slane %v2548, 7
    %v2552 = vsub.f32 %v2111, %v2550
    %v2553 = vperm.slane %v2547, 1
    %v2554 = vmul.f32 %v2484, %v2553
    %v2555 = vmul.f32 %v2485, %v2553
    %v2556 = vmul.f32 %v2486, %v2553
    %v2557 = vmul.f32 %v2487, %v2553
    %v2558 = vmul.f32 %v2488, %v2553
    %v2559 = vmul.f32 %v2489, %v2553
    %v2560 = vmul.f32 %v2490, %v2553
    %v2561 = vmul.f32 %v2491, %v2553
    %v2562 = vperm.slane %v2552, 2
    %v2563 = vadd.f32 %v2554, %v2562
    %v2564 = vadd.f32 %v2555, %v2562
    %v2565 = vadd.f32 %v2556, %v2562
    %v2566 = vadd.f32 %v2557, %v2562
    %v2567 = vadd.f32 %v2558, %v2562
    %v2568 = vadd.f32 %v2559, %v2562
    %v2569 = vadd.f32 %v2560, %v2562
    %v2570 = vadd.f32 %v2561, %v2562
    %2571 = vst [vmem:[#allocation8] sm:$0xff] %v2563
    %2572 = vst [vmem:[#allocation8 + $0x8] sm:$0xff] %v2564
    %2573 = vst [vmem:[#allocation8 + $0x10] sm:$0xff] %v2565
    %2574 = vst [vmem:[#allocation8 + $0x18] sm:$0xff] %v2566
    %2575 = vst [vmem:[#allocation8 + $0x20] sm:$0xff] %v2567
    %2576 = vst [vmem:[#allocation8 + $0x28] sm:$0xff] %v2568
    %2577 = vst [vmem:[#allocation8 + $0x30] sm:$0xff] %v2569
    %2578 = vst [vmem:[#allocation8 + $0x38] sm:$0xff] %v2570
    // Predicated region
    $region26: #{tpu_custom_call.1} parent=1 // pred_check
      _
    $region27: #{tpu_custom_call.1} parent=1 // pred_check_branch
      %2580 = sbr.rel (0) target = $region29
    $region28: #{tpu_custom_call.1} parent=1 // pred_region
      %2582 = vsyncadd [#allocation4], 0
      %s2583 = sshll.u32 [#allocation8], 4
      %s2584 = int_to_ptr.vmem [resolvable:$true] %s2583
      %s2585 = sshll.u32 %s3, 4
      %s2586 = int_to_ptr.hbm [resolvable:$true] %s2585
      %2591 = dma.vmem_to_hbm [thread:$0]  %s2584, 1024, %s2586, [#allocation4], 128, 128, 8
    $region29: #{tpu_custom_call.1} parent=1 // pred_fallthru
      _
    // Predicated region
    $region30: #{tpu_custom_call.1} parent=1 // pred_check
      _
    $region31: #{tpu_custom_call.1} parent=1 // pred_check_branch
      %2593 = sbr.rel (0) target = $region33
    $region32: #{tpu_custom_call.1} parent=1 // pred_region
      %2595 = dma.done [#allocation4], 1024
    $region33: #{tpu_custom_call.1} parent=1 // pred_fallthru
      _
    %2596 = vsyncpa [#allocation3], 1
    %2597 = vsyncpa [#allocation6], 1
    %2598 = vsyncpa [#allocation4], 1

</llo_original>
